<compile_context>
chip_gen: v7x
topology: tpu7x:2x2x1
jax: 0.10.0
libtpu: 0.0.40
codegen_flags: <defaults>
</compile_context>

<pallas_src>
import functools
import math

import jax
import jax.numpy as jnp
from jax.experimental import pallas as pl
from jax.experimental.pallas import tpu as pltpu

_EPS = 1e-5
_LANE = 128   # channel-block width == vreg lane width -> lane-dense stores


def _conv_bn_relu_kernel(x_ref, w_ref, gamma_ref, beta_ref, o_ref, *scratch,
                         pool: bool, pad_out: bool):
    """One Conv3x3(pad=1) + train-mode BN + ReLU stage for one 128-wide
    output-channel block.

    pool=True  : x_ref is an unpadded NHWC image; a fused 2x2/2 maxpool is
                 applied first and the pooled result is written (interior
                 only) into a spatially padded bf16 scratch.
    pool=False : x_ref is already spatially padded (zero halo) by the
                 previous stage -> taps are read straight off the ref.
    pad_out    : write the output with a zero halo so the next stage can
                 consume it without re-padding.
    """
    n = x_ref.shape[0]

    if pool:
        pad_ref, = scratch
        h, w, cin = x_ref.shape[1], x_ref.shape[2], x_ref.shape[3]
        hp, wp = h // 2, w // 2
        # 2x2 stride-2 maxpool via strided VMEM loads (proven lowering; the
        # pool is a small fraction of the work once channels are >= 64).
        p00 = x_ref[:, pl.ds(0, hp, 2), pl.ds(0, wp, 2), :]
        p01 = x_ref[:, pl.ds(0, hp, 2), pl.ds(1, wp, 2), :]
        p10 = x_ref[:, pl.ds(1, hp, 2), pl.ds(0, wp, 2), :]
        p11 = x_ref[:, pl.ds(1, hp, 2), pl.ds(1, wp, 2), :]
        pooled = jnp.maximum(jnp.maximum(p00, p01), jnp.maximum(p10, p11))
        # Zero only the 1-pixel halo (4 slabs); interior is fully overwritten,
        # so no full-buffer zero fill (saves a full store pass).
        zr = jnp.zeros((n, 1, wp + 2, cin), pad_ref.dtype)
        zc = jnp.zeros((n, hp + 2, 1, cin), pad_ref.dtype)
        pad_ref[:, 0:1, :, :] = zr
        pad_ref[:, hp + 1:hp + 2, :, :] = zr
        pad_ref[:, :, 0:1, :] = zc
        pad_ref[:, :, wp + 1:wp + 2, :] = zc
        pad_ref[:, 1:hp + 1, 1:wp + 1, :] = pooled.astype(pad_ref.dtype)
        src = pad_ref
    else:
        src = x_ref
        hp, wp, cin = x_ref.shape[1] - 2, x_ref.shape[2] - 2, x_ref.shape[3]

    m = n * hp * wp
    bc = w_ref.shape[1]

    # im2col: fuse the 9 taps into a single (M, 9*Cin) x (9*Cin, BC) bf16
    # MXU matmul with f32 accumulation (instead of 9 tiny-K f32 dots).
    pats = [src[:, di:di + hp, dj:dj + wp, :]
            for di in range(3) for dj in range(3)]
    col = jnp.concatenate(pats, axis=-1).reshape(m, 9 * cin)
    acc = jnp.dot(col.astype(jnp.bfloat16), w_ref[...],
                  preferred_element_type=jnp.float32)            # (M, BC) f32

    # Train-mode BatchNorm (biased variance, eps=1e-5), single pass over acc.
    # NB: the conv bias is omitted on purpose -- BN mean subtraction cancels
    # a per-channel constant exactly.
    inv_m = 1.0 / m
    mean = jnp.sum(acc, axis=0, keepdims=True) * inv_m           # (1, BC)
    msq = jnp.sum(acc * acc, axis=0, keepdims=True) * inv_m
    var = msq - mean * mean
    scale = gamma_ref[...] * jax.lax.rsqrt(var + _EPS)
    shift = beta_ref[...] - mean * scale
    y = jnp.maximum(acc * scale + shift, 0.0).reshape(n, hp, wp, bc)

    if pad_out:
        zr = jnp.zeros((n, 1, wp + 2, bc), o_ref.dtype)
        zc = jnp.zeros((n, hp + 2, 1, bc), o_ref.dtype)
        o_ref[:, 0:1, :, :] = zr
        o_ref[:, hp + 1:hp + 2, :, :] = zr
        o_ref[:, :, 0:1, :] = zc
        o_ref[:, :, wp + 1:wp + 2, :] = zc
        o_ref[:, 1:hp + 1, 1:wp + 1, :] = y.astype(o_ref.dtype)
    else:
        o_ref[...] = y.astype(o_ref.dtype)


def _conv_bn_relu_stage(x, w_flat, gamma, beta, *, pool, pad_out, out_dtype):
    """x: NHWC activation (unpadded if pool else halo-padded, all channels);
    w_flat: (9*Cin, CP) bf16; gamma/beta: (1, CP) f32.  Grid over CP//128
    output-channel blocks (BN stats are per-channel -> blocks independent)."""
    n, hin, win, cin = x.shape
    hp, wp = (hin // 2, win // 2) if pool else (hin - 2, win - 2)
    cp = w_flat.shape[1]
    assert cp % _LANE == 0
    nblk = cp // _LANE
    m = n * hp * wp

    if pad_out:
        out_shape, out_block = (n, hp + 2, wp + 2, cp), (n, hp + 2, wp + 2, _LANE)
    else:
        out_shape, out_block = (n, hp, wp, cp), (n, hp, wp, _LANE)

    scratch = []
    if pool:
        scratch.append(pltpu.VMEM((n, hp + 2, wp + 2, cin), jnp.bfloat16))

    # VMEM budget: (double-buffered) blocks + scratch + large register temps.
    out_itemsize = jnp.dtype(out_dtype).itemsize
    blk_bytes = (x.size * x.dtype.itemsize            # full activation (resident)
                 + 9 * cin * _LANE * 2                # weight block (bf16)
                 + 2 * _LANE * 4                      # gamma / beta blocks
                 + math.prod(out_block) * out_itemsize)
    tmp_bytes = m * 9 * cin * 2 + 2 * m * _LANE * 4   # im2col + acc/y
    scr_bytes = n * (hp + 2) * (wp + 2) * cin * 2 if pool else 0
    vmem_limit = int(min(2 * blk_bytes + tmp_bytes + scr_bytes + (4 << 20),
                         56 << 20))                   # stay under v7x's 64 MiB

    cost = pl.CostEstimate(
        flops=2 * m * (9 * cin) * cp,
        transcendentals=cp,
        bytes_accessed=(x.size * x.dtype.itemsize + w_flat.size * 2
                        + 2 * cp * 4 + math.prod(out_shape) * out_itemsize))

    kernel = functools.partial(_conv_bn_relu_kernel, pool=pool, pad_out=pad_out)
    return pl.pallas_call(
        kernel,
        out_shape=jax.ShapeDtypeStruct(out_shape, out_dtype),
        grid_spec=pltpu.PrefetchScalarGridSpec(
            num_scalar_prefetch=0,
            grid=(nblk,),
            in_specs=[
                # Full activation, constant block index -> fetched once,
                # stays VMEM-resident across channel blocks.
                pl.BlockSpec((n, hin, win, cin), lambda j: (0, 0, 0, 0)),
                pl.BlockSpec((9 * cin, _LANE), lambda j: (0, j)),
                pl.BlockSpec((1, _LANE), lambda j: (0, j)),
                pl.BlockSpec((1, _LANE), lambda j: (0, j)),
            ],
            out_specs=pl.BlockSpec(out_block, lambda j: (0, 0, 0, j)),
            scratch_shapes=scratch,
        ),
        compiler_params=pltpu.CompilerParams(
            dimension_semantics=("parallel",),
            vmem_limit_bytes=vmem_limit),
        cost_estimate=cost,
    )(x, w_flat, gamma, beta)


def _round_up(v, mult):
    return (v + mult - 1) // mult * mult


def _prep_conv_params(w_hwio, gamma, beta, cin_pad, cout_pad):
    """Zero-pad channels to (cin_pad, cout_pad), flatten HWIO -> (9*Cin, Cout),
    cast weights to bf16 (MXU-native); gamma/beta stay f32 for the VPU."""
    kh, kw, cin, cout = w_hwio.shape
    w = jnp.pad(w_hwio, ((0, 0), (0, 0), (0, cin_pad - cin), (0, cout_pad - cout)))
    w_flat = w.reshape(kh * kw * cin_pad, cout_pad).astype(jnp.bfloat16)
    g = jnp.pad(gamma, (0, cout_pad - cout), constant_values=1.0)
    b = jnp.pad(beta, (0, cout_pad - cout))
    return (w_flat,
            g.reshape(1, -1).astype(jnp.float32),
            b.reshape(1, -1).astype(jnp.float32))


def down_forward(x_nchw, params):
    """x_nchw: (N, Cin, H, W) f32 -> (N, Cout, H//2, W//2) f32."""
    # Conv biases are unpacked but intentionally unused: under training-mode
    # BatchNorm a per-channel constant bias is exactly cancelled by the mean
    # subtraction, so passing it to the kernel would be pure wasted work.
    w1, _b1, g1, be1, w2, _b2, g2, be2 = params
    cin, cmid, cout = w1.shape[2], w1.shape[3], w2.shape[3]
    cmid_p = _round_up(cmid, _LANE)
    cout_p = _round_up(cout, _LANE)

    x = jnp.transpose(x_nchw, (0, 2, 3, 1)).astype(jnp.float32)      # NHWC

    w1f, g1p, be1p = _prep_conv_params(w1, g1, be1, cin, cmid_p)
    w2f, g2p, be2p = _prep_conv_params(w2, g2, be2, cmid_p, cout_p)

    # Stage 1: maxpool + conv1 + BN1 + ReLU, output halo-padded bf16.
    h1p = _conv_bn_relu_stage(x, w1f, g1p, be1p,
                              pool=True, pad_out=True, out_dtype=jnp.bfloat16)
    # Stage 2: conv2 + BN2 + ReLU directly on the pre-padded bf16 activation.
    y = _conv_bn_relu_stage(h1p, w2f, g2p, be2p,
                            pool=False, pad_out=False, out_dtype=jnp.float32)

    y = y[..., :cout]                                                # drop lane pad
    return jnp.transpose(y, (0, 3, 1, 2))                            # back to NCHW


def init_params(key, in_channels, out_channels):
    """Deterministic parameter init (shapes per Down.__init__); mid = out."""
    mid = out_channels
    k1, k2, k3, k4 = jax.random.split(key, 4)
    w1 = jax.random.normal(k1, (3, 3, in_channels, mid), jnp.float32) * 0.1   # HWIO
    b1 = jax.random.normal(k2, (mid,), jnp.float32) * 0.1
    g1 = jnp.ones((mid,), jnp.float32)     # BN weight init = 1
    be1 = jnp.zeros((mid,), jnp.float32)   # BN bias init = 0
    w2 = jax.random.normal(k3, (3, 3, mid, out_channels), jnp.float32) * 0.1
    b2 = jax.random.normal(k4, (out_channels,), jnp.float32) * 0.1
    g2 = jnp.ones((out_channels,), jnp.float32)
    be2 = jnp.zeros((out_channels,), jnp.float32)
    return (w1, b1, g1, be1, w2, b2, g2, be2)


def _reference_down(x_nchw, params):
    """Pure-JAX f32 reference of the PyTorch forward pass (bias included; its
    effect is cancelled by training-mode BN, which the kernel exploits)."""
    w1, b1, g1, be1, w2, b2, g2, be2 = params
    x = jnp.transpose(x_nchw, (0, 2, 3, 1))
    n, h, w, c = x.shape
    p = x.reshape(n, h // 2, 2, w // 2, 2, c).max(axis=(2, 4))

    def conv_bn_relu(hin, wk, bk, gk, bek):
        y = jax.lax.conv_general_dilated(
            hin, wk, window_strides=(1, 1), padding="SAME",
            dimension_numbers=("NHWC", "HWIO", "NHWC")) + bk.reshape(1, 1, 1, -1)
        mu = y.mean(axis=(0, 1, 2))
        vv = ((y - mu) ** 2).mean(axis=(0, 1, 2))
        return jnp.maximum((y - mu) * jax.lax.rsqrt(vv + _EPS) * gk + bek, 0.0)

    hmid = conv_bn_relu(p, w1, b1, g1, be1)
    o = conv_bn_relu(hmid, w2, b2, g2, be2)
    return jnp.transpose(o, (0, 3, 1, 2))


if __name__ == "__main__":
    key = jax.random.PRNGKey(0)
    kx, kp = jax.random.split(key)

    N, Cin, H, W = 2, 4, 16, 16
    Cout = 8
    x = jax.random.normal(kx, (N, Cin, H, W), jnp.float32)           # NCHW like PyTorch
    params = init_params(kp, Cin, Cout)

    out = jax.block_until_ready(down_forward(x, params))
    ref = jax.block_until_ready(_reference_down(x, params))

    assert out.shape == (N, Cout, H // 2, W // 2)
    # bf16 MXU inputs (per perf guidance) vs. a pure-f32 reference -> relaxed
    # tolerance; BN normalization absorbs most of the per-channel rounding.
    assert jnp.allclose(out, ref, atol=5e-2, rtol=5e-2), float(
        jnp.max(jnp.abs(out - ref)))

    print("KERNEL_OK")
</pallas_src>

<mosaic_0001>
module attributes {stable_mosaic.version = 11 : i64} {
  func.func @_conv_bn_relu_kernel(%arg0: i32, %arg1: memref<2x16x16x4xf32, #tpu.memory_space<vmem>>, %arg2: memref<36x128xbf16, #tpu.memory_space<vmem>>, %arg3: memref<1x128xf32, #tpu.memory_space<vmem>>, %arg4: memref<1x128xf32, #tpu.memory_space<vmem>>, %arg5: memref<2x10x10x128xbf16, #tpu.memory_space<vmem>>, %arg6: memref<2x10x10x4xbf16, #tpu.memory_space<vmem>>) attributes {dimension_semantics = [#tpu.dimension_semantics<parallel>], iteration_bounds = array<i64: 1>, scalar_prefetch = 0 : i64, scratch_operands = 1 : i64, tpu.core_type = #tpu.core_type<tc>, window_params = [{pipeline_mode = #tpu.pipeline_mode<synchronous>, transform_indices = @transform_0, window_bounds = array<i64: 2, 16, 16, 4>}, {transform_indices = @transform_1, window_bounds = array<i64: 36, 128>}, {transform_indices = @transform_2, window_bounds = array<i64: 1, 128>}, {transform_indices = @transform_3, window_bounds = array<i64: 1, 128>}, {transform_indices = @transform_4, window_bounds = array<i64: 2, 10, 10, 128>}]} {
    %c0 = arith.constant 0 : index
    %c0_0 = arith.constant 0 : index
    %c0_1 = arith.constant 0 : index
    %c0_2 = arith.constant 0 : index
    %0 = tpu.strided_load %arg1[%c0, %c0_0, %c0_1, %c0_2] {strides = array<i32: 1, 2, 2, 1>} : memref<2x16x16x4xf32, #tpu.memory_space<vmem>>, vector<2x8x8x4xf32>
    %c0_3 = arith.constant 0 : index
    %c0_4 = arith.constant 0 : index
    %c1 = arith.constant 1 : index
    %c0_5 = arith.constant 0 : index
    %1 = tpu.strided_load %arg1[%c0_3, %c0_4, %c1, %c0_5] {strides = array<i32: 1, 2, 2, 1>} : memref<2x16x16x4xf32, #tpu.memory_space<vmem>>, vector<2x8x8x4xf32>
    %c0_6 = arith.constant 0 : index
    %c1_7 = arith.constant 1 : index
    %c0_8 = arith.constant 0 : index
    %c0_9 = arith.constant 0 : index
    %2 = tpu.strided_load %arg1[%c0_6, %c1_7, %c0_8, %c0_9] {strides = array<i32: 1, 2, 2, 1>} : memref<2x16x16x4xf32, #tpu.memory_space<vmem>>, vector<2x8x8x4xf32>
    %c0_10 = arith.constant 0 : index
    %c1_11 = arith.constant 1 : index
    %c1_12 = arith.constant 1 : index
    %c0_13 = arith.constant 0 : index
    %3 = tpu.strided_load %arg1[%c0_10, %c1_11, %c1_12, %c0_13] {strides = array<i32: 1, 2, 2, 1>} : memref<2x16x16x4xf32, #tpu.memory_space<vmem>>, vector<2x8x8x4xf32>
    %4 = arith.maximumf %0, %1 : vector<2x8x8x4xf32>
    %5 = arith.maximumf %2, %3 : vector<2x8x8x4xf32>
    %6 = arith.maximumf %4, %5 : vector<2x8x8x4xf32>
    %cst = arith.constant 0.000000e+00 : bf16
    %7 = vector.broadcast %cst : bf16 to vector<2x1x10x4xbf16>
    %cst_14 = arith.constant 0.000000e+00 : bf16
    %8 = vector.broadcast %cst_14 : bf16 to vector<2x10x1x4xbf16>
    %c0_15 = arith.constant 0 : index
    %c0_16 = arith.constant 0 : index
    %c0_17 = arith.constant 0 : index
    %c0_18 = arith.constant 0 : index
    %9 = vector.load %arg6[%c0_15, %c0_16, %c0_17, %c0_18] : memref<2x10x10x4xbf16, #tpu.memory_space<vmem>>, vector<2x1x10x4xbf16>
    tpu.vector_store %arg6[%c0_15, %c0_16, %c0_17, %c0_18], %7 {strides = array<i32>} : memref<2x10x10x4xbf16, #tpu.memory_space<vmem>>, vector<2x1x10x4xbf16>,
    %c0_19 = arith.constant 0 : index
    %c9 = arith.constant 9 : index
    %c0_20 = arith.constant 0 : index
    %c0_21 = arith.constant 0 : index
    %10 = vector.load %arg6[%c0_19, %c9, %c0_20, %c0_21] : memref<2x10x10x4xbf16, #tpu.memory_space<vmem>>, vector<2x1x10x4xbf16>
    tpu.vector_store %arg6[%c0_19, %c9, %c0_20, %c0_21], %7 {strides = array<i32>} : memref<2x10x10x4xbf16, #tpu.memory_space<vmem>>, vector<2x1x10x4xbf16>,
    %c0_22 = arith.constant 0 : index
    %c0_23 = arith.constant 0 : index
    %c0_24 = arith.constant 0 : index
    %c0_25 = arith.constant 0 : index
    %11 = vector.load %arg6[%c0_22, %c0_23, %c0_24, %c0_25] : memref<2x10x10x4xbf16, #tpu.memory_space<vmem>>, vector<2x10x1x4xbf16>
    tpu.vector_store %arg6[%c0_22, %c0_23, %c0_24, %c0_25], %8 {strides = array<i32>} : memref<2x10x10x4xbf16, #tpu.memory_space<vmem>>, vector<2x10x1x4xbf16>,
    %c0_26 = arith.constant 0 : index
    %c0_27 = arith.constant 0 : index
    %c9_28 = arith.constant 9 : index
    %c0_29 = arith.constant 0 : index
    %12 = vector.load %arg6[%c0_26, %c0_27, %c9_28, %c0_29] : memref<2x10x10x4xbf16, #tpu.memory_space<vmem>>, vector<2x10x1x4xbf16>
    tpu.vector_store %arg6[%c0_26, %c0_27, %c9_28, %c0_29], %8 {strides = array<i32>} : memref<2x10x10x4xbf16, #tpu.memory_space<vmem>>, vector<2x10x1x4xbf16>,
    %13 = arith.truncf %6 : vector<2x8x8x4xf32> to vector<2x8x8x4xbf16>
    %c0_30 = arith.constant 0 : index
    %c1_31 = arith.constant 1 : index
    %c1_32 = arith.constant 1 : index
    %c0_33 = arith.constant 0 : index
    %14 = vector.load %arg6[%c0_30, %c1_31, %c1_32, %c0_33] : memref<2x10x10x4xbf16, #tpu.memory_space<vmem>>, vector<2x8x8x4xbf16>
    tpu.vector_store %arg6[%c0_30, %c1_31, %c1_32, %c0_33], %13 {strides = array<i32>} : memref<2x10x10x4xbf16, #tpu.memory_space<vmem>>, vector<2x8x8x4xbf16>,
    %c0_34 = arith.constant 0 : index
    %c0_35 = arith.constant 0 : index
    %c0_36 = arith.constant 0 : index
    %c0_37 = arith.constant 0 : index
    %15 = vector.load %arg6[%c0_34, %c0_35, %c0_36, %c0_37] : memref<2x10x10x4xbf16, #tpu.memory_space<vmem>>, vector<2x8x8x4xbf16>
    %c0_38 = arith.constant 0 : index
    %c0_39 = arith.constant 0 : index
    %c1_40 = arith.constant 1 : index
    %c0_41 = arith.constant 0 : index
    %16 = vector.load %arg6[%c0_38, %c0_39, %c1_40, %c0_41] : memref<2x10x10x4xbf16, #tpu.memory_space<vmem>>, vector<2x8x8x4xbf16>
    %c0_42 = arith.constant 0 : index
    %c0_43 = arith.constant 0 : index
    %c2 = arith.constant 2 : index
    %c0_44 = arith.constant 0 : index
    %17 = vector.load %arg6[%c0_42, %c0_43, %c2, %c0_44] : memref<2x10x10x4xbf16, #tpu.memory_space<vmem>>, vector<2x8x8x4xbf16>
    %c0_45 = arith.constant 0 : index
    %c1_46 = arith.constant 1 : index
    %c0_47 = arith.constant 0 : index
    %c0_48 = arith.constant 0 : index
    %18 = vector.load %arg6[%c0_45, %c1_46, %c0_47, %c0_48] : memref<2x10x10x4xbf16, #tpu.memory_space<vmem>>, vector<2x8x8x4xbf16>
    %c0_49 = arith.constant 0 : index
    %c1_50 = arith.constant 1 : index
    %c1_51 = arith.constant 1 : index
    %c0_52 = arith.constant 0 : index
    %19 = vector.load %arg6[%c0_49, %c1_50, %c1_51, %c0_52] : memref<2x10x10x4xbf16, #tpu.memory_space<vmem>>, vector<2x8x8x4xbf16>
    %c0_53 = arith.constant 0 : index
    %c1_54 = arith.constant 1 : index
    %c2_55 = arith.constant 2 : index
    %c0_56 = arith.constant 0 : index
    %20 = vector.load %arg6[%c0_53, %c1_54, %c2_55, %c0_56] : memref<2x10x10x4xbf16, #tpu.memory_space<vmem>>, vector<2x8x8x4xbf16>
    %c0_57 = arith.constant 0 : index
    %c2_58 = arith.constant 2 : index
    %c0_59 = arith.constant 0 : index
    %c0_60 = arith.constant 0 : index
    %21 = vector.load %arg6[%c0_57, %c2_58, %c0_59, %c0_60] : memref<2x10x10x4xbf16, #tpu.memory_space<vmem>>, vector<2x8x8x4xbf16>
    %c0_61 = arith.constant 0 : index
    %c2_62 = arith.constant 2 : index
    %c1_63 = arith.constant 1 : index
    %c0_64 = arith.constant 0 : index
    %22 = vector.load %arg6[%c0_61, %c2_62, %c1_63, %c0_64] : memref<2x10x10x4xbf16, #tpu.memory_space<vmem>>, vector<2x8x8x4xbf16>
    %c0_65 = arith.constant 0 : index
    %c2_66 = arith.constant 2 : index
    %c2_67 = arith.constant 2 : index
    %c0_68 = arith.constant 0 : index
    %23 = vector.load %arg6[%c0_65, %c2_66, %c2_67, %c0_68] : memref<2x10x10x4xbf16, #tpu.memory_space<vmem>>, vector<2x8x8x4xbf16>
    %24 = tpu.concatenate %15, %16, %17, %18, %19, %20, %21, %22, %23 in 3 : vector<2x8x8x4xbf16>, vector<2x8x8x4xbf16>, vector<2x8x8x4xbf16>, vector<2x8x8x4xbf16>, vector<2x8x8x4xbf16>, vector<2x8x8x4xbf16>, vector<2x8x8x4xbf16>, vector<2x8x8x4xbf16>, vector<2x8x8x4xbf16> -> vector<2x8x8x36xbf16>
    %25 = vector.shape_cast %24 : vector<2x8x8x36xbf16> to vector<128x36xbf16>
    %c0_69 = arith.constant 0 : index
    %c0_70 = arith.constant 0 : index
    %26 = vector.load %arg2[%c0_69, %c0_70] : memref<36x128xbf16, #tpu.memory_space<vmem>>, vector<36x128xbf16>
    %cst_71 = arith.constant dense<0.000000e+00> : vector<128x128xf32>
    %27 = tpu.matmul %25, %26, %cst_71 {dimension_numbers = #tpu.dot_dimension_numbers<[1], [0], [0], [1], [0, 0, 1, 1], [], []>} : vector<128x36xbf16>, vector<36x128xbf16>, vector<128x128xf32> -> vector<128x128xf32>
    %cst_72 = arith.constant dense<0.000000e+00> : vector<128xf32>
    %28 = vector.multi_reduction <add>, %27, %cst_72 [0] : vector<128x128xf32> to vector<128xf32>
    %29 = vector.shape_cast %28 : vector<128xf32> to vector<1x128xf32>
    %cst_73 = arith.constant 7.812500e-03 : f32
    %30 = vector.broadcast %cst_73 : f32 to vector<1x128xf32>
    %31 = arith.mulf %29, %30 : vector<1x128xf32>
    %32 = arith.mulf %27, %27 : vector<128x128xf32>
    %cst_74 = arith.constant dense<0.000000e+00> : vector<128xf32>
    %33 = vector.multi_reduction <add>, %32, %cst_74 [0] : vector<128x128xf32> to vector<128xf32>
    %34 = vector.shape_cast %33 : vector<128xf32> to vector<1x128xf32>
    %cst_75 = arith.constant 7.812500e-03 : f32
    %35 = vector.broadcast %cst_75 : f32 to vector<1x128xf32>
    %36 = arith.mulf %34, %35 : vector<1x128xf32>
    %37 = arith.mulf %31, %31 : vector<1x128xf32>
    %38 = arith.subf %36, %37 : vector<1x128xf32>
    %c0_76 = arith.constant 0 : index
    %c0_77 = arith.constant 0 : index
    %39 = vector.load %arg3[%c0_76, %c0_77] : memref<1x128xf32, #tpu.memory_space<vmem>>, vector<1x128xf32>
    %cst_78 = arith.constant 9.99999974E-6 : f32
    %40 = vector.broadcast %cst_78 : f32 to vector<1x128xf32>
    %41 = arith.addf %38, %40 : vector<1x128xf32>
    %42 = math.rsqrt %41 : vector<1x128xf32>
    %43 = arith.mulf %39, %42 : vector<1x128xf32>
    %c0_79 = arith.constant 0 : index
    %c0_80 = arith.constant 0 : index
    %44 = vector.load %arg4[%c0_79, %c0_80] : memref<1x128xf32, #tpu.memory_space<vmem>>, vector<1x128xf32>
    %45 = arith.mulf %31, %43 : vector<1x128xf32>
    %46 = arith.subf %44, %45 : vector<1x128xf32>
    %47 = vector.broadcast %43 : vector<1x128xf32> to vector<128x128xf32>
    %48 = arith.mulf %27, %47 : vector<128x128xf32>
    %49 = vector.broadcast %46 : vector<1x128xf32> to vector<128x128xf32>
    %50 = arith.addf %48, %49 : vector<128x128xf32>
    %cst_81 = arith.constant 0.000000e+00 : f32
    %51 = vector.broadcast %cst_81 : f32 to vector<128x128xf32>
    %52 = arith.maximumf %50, %51 : vector<128x128xf32>
    %53 = vector.shape_cast %52 : vector<128x128xf32> to vector<2x8x8x128xf32>
    %cst_82 = arith.constant 0.000000e+00 : bf16
    %54 = vector.broadcast %cst_82 : bf16 to vector<2x1x10x128xbf16>
    %cst_83 = arith.constant 0.000000e+00 : bf16
    %55 = vector.broadcast %cst_83 : bf16 to vector<2x10x1x128xbf16>
    %c0_84 = arith.constant 0 : index
    %c0_85 = arith.constant 0 : index
    %c0_86 = arith.constant 0 : index
    %c0_87 = arith.constant 0 : index
    %56 = vector.load %arg5[%c0_84, %c0_85, %c0_86, %c0_87] : memref<2x10x10x128xbf16, #tpu.memory_space<vmem>>, vector<2x1x10x128xbf16>
    tpu.vector_store %arg5[%c0_84, %c0_85, %c0_86, %c0_87], %54 {strides = array<i32>} : memref<2x10x10x128xbf16, #tpu.memory_space<vmem>>, vector<2x1x10x128xbf16>,
    %c0_88 = arith.constant 0 : index
    %c9_89 = arith.constant 9 : index
    %c0_90 = arith.constant 0 : index
    %c0_91 = arith.constant 0 : index
    %57 = vector.load %arg5[%c0_88, %c9_89, %c0_90, %c0_91] : memref<2x10x10x128xbf16, #tpu.memory_space<vmem>>, vector<2x1x10x128xbf16>
    tpu.vector_store %arg5[%c0_88, %c9_89, %c0_90, %c0_91], %54 {strides = array<i32>} : memref<2x10x10x128xbf16, #tpu.memory_space<vmem>>, vector<2x1x10x128xbf16>,
    %c0_92 = arith.constant 0 : index
    %c0_93 = arith.constant 0 : index
    %c0_94 = arith.constant 0 : index
    %c0_95 = arith.constant 0 : index
    %58 = vector.load %arg5[%c0_92, %c0_93, %c0_94, %c0_95] : memref<2x10x10x128xbf16, #tpu.memory_space<vmem>>, vector<2x10x1x128xbf16>
    tpu.vector_store %arg5[%c0_92, %c0_93, %c0_94, %c0_95], %55 {strides = array<i32>} : memref<2x10x10x128xbf16, #tpu.memory_space<vmem>>, vector<2x10x1x128xbf16>,
    %c0_96 = arith.constant 0 : index
    %c0_97 = arith.constant 0 : index
    %c9_98 = arith.constant 9 : index
    %c0_99 = arith.constant 0 : index
    %59 = vector.load %arg5[%c0_96, %c0_97, %c9_98, %c0_99] : memref<2x10x10x128xbf16, #tpu.memory_space<vmem>>, vector<2x10x1x128xbf16>
    tpu.vector_store %arg5[%c0_96, %c0_97, %c9_98, %c0_99], %55 {strides = array<i32>} : memref<2x10x10x128xbf16, #tpu.memory_space<vmem>>, vector<2x10x1x128xbf16>,
    %60 = arith.truncf %53 : vector<2x8x8x128xf32> to vector<2x8x8x128xbf16>
    %c0_100 = arith.constant 0 : index
    %c1_101 = arith.constant 1 : index
    %c1_102 = arith.constant 1 : index
    %c0_103 = arith.constant 0 : index
    %61 = vector.load %arg5[%c0_100, %c1_101, %c1_102, %c0_103] : memref<2x10x10x128xbf16, #tpu.memory_space<vmem>>, vector<2x8x8x128xbf16>
    tpu.vector_store %arg5[%c0_100, %c1_101, %c1_102, %c0_103], %60 {strides = array<i32>} : memref<2x10x10x128xbf16, #tpu.memory_space<vmem>>, vector<2x8x8x128xbf16>,
    return
  }
  func.func @transform_0(%arg0: i32) -> (i32, i32, i32, i32) {
    %c0_i32 = arith.constant 0 : i32
    %c0_i32_0 = arith.constant 0 : i32
    %c0_i32_1 = arith.constant 0 : i32
    %c0_i32_2 = arith.constant 0 : i32
    %c0_i32_3 = arith.constant 0 : i32
    return %c0_i32, %c0_i32_0, %c0_i32_1, %c0_i32_2 : i32, i32, i32, i32
  }
  func.func @transform_1(%arg0: i32) -> (i32, i32) {
    %c0_i32 = arith.constant 0 : i32
    %c0_i32_0 = arith.constant 0 : i32
    return %c0_i32, %arg0 : i32, i32
  }
  func.func @transform_2(%arg0: i32) -> (i32, i32) {
    %c0_i32 = arith.constant 0 : i32
    %c0_i32_0 = arith.constant 0 : i32
    return %c0_i32, %arg0 : i32, i32
  }
  func.func @transform_3(%arg0: i32) -> (i32, i32) {
    %c0_i32 = arith.constant 0 : i32
    %c0_i32_0 = arith.constant 0 : i32
    return %c0_i32, %arg0 : i32, i32
  }
  func.func @transform_4(%arg0: i32) -> (i32, i32, i32, i32) {
    %c0_i32 = arith.constant 0 : i32
    %c0_i32_0 = arith.constant 0 : i32
    %c0_i32_1 = arith.constant 0 : i32
    %c0_i32_2 = arith.constant 0 : i32
    return %c0_i32, %c0_i32_0, %c0_i32_1, %arg0 : i32, i32, i32, i32
  }
}

</mosaic_0001>

<llo_original>
// kernel: tpu_custom_call.1
$region0: #{tpu_custom_call.1}
  #allocation0 [shape = 'u32[]', space=smem, size = 0x4, offset = 0x4, fixed_abs, tag = 'smem constant byte address 0x4 - core index']
  #allocation1 [shape = 'u32[144,128]{1,0:T(1,128)}', space=vmem, size = 0x12000, scoped, tag = 'internal scratch']
  #allocation2 [shape = 'bf16[2,10,10,4]{3,2,1,0:T(8,128)(2,1)}', space=vmem, size = 0x14000, scoped, tag = 'scratch operand']
  %s0 = inlined_call_operand.vmem [shape: f32[2,16,16,4], index: 0, kind: input, shape index: {}]
  %s1 = inlined_call_operand.vmem [shape: bf16[36,128], index: 1, kind: input, shape index: {}]
  %s2 = inlined_call_operand.vmem [shape: f32[1,128], index: 2, kind: input, shape index: {}]
  %s3 = inlined_call_operand.vmem [shape: f32[1,128], index: 3, kind: input, shape index: {}]
  %s4 = inlined_call_operand.vmem [shape: bf16[2,10,10,128], index: 4, kind: output, shape index: {}]
  %s5 = sld [smem:[#allocation0]]
  $region26: #{tpu_custom_call.1} parent=0
    _
  %s7 = ssub.s32 1, %s5
  %s8 = scalar_select 0, %s7, %s5
  // Predicated region
  $region2: #{tpu_custom_call.1} parent=0 // pred_check
    _
  $region3: #{tpu_custom_call.1} parent=0 // pred_check_branch
    %10 = sbr.rel (0) target = $region5
  $region4: #{tpu_custom_call.1} parent=0 // pred_region
    _
  $region5: #{tpu_custom_call.1} parent=0 // pred_fallthru
    _
  // Predicated region
  $region6: #{tpu_custom_call.1} parent=0 // pred_check
    _
  $region7: #{tpu_custom_call.1} parent=0 // pred_check_branch
    %12 = sbr.rel (0) target = $region9
  $region8: #{tpu_custom_call.1} parent=0 // pred_region
    _
  $region9: #{tpu_custom_call.1} parent=0 // pred_fallthru
    _
  // Predicated region
  $region10: #{tpu_custom_call.1} parent=0 // pred_check
    _
  $region11: #{tpu_custom_call.1} parent=0 // pred_check_branch
    %14 = sbr.rel (0) target = $region13
  $region12: #{tpu_custom_call.1} parent=0 // pred_region
    _
  $region13: #{tpu_custom_call.1} parent=0 // pred_fallthru
    _
  // Predicated region
  $region14: #{tpu_custom_call.1} parent=0 // pred_check
    _
  $region15: #{tpu_custom_call.1} parent=0 // pred_check_branch
    %16 = sbr.rel (0) target = $region17
  $region16: #{tpu_custom_call.1} parent=0 // pred_region
    _
  $region17: #{tpu_custom_call.1} parent=0 // pred_fallthru
    _
  %v18 = vld [vmem:[%s0] ss:$2 sm:$0xff]
  %s19 = scalar_lea.vmem %s0, 32
  %v20 = vld [vmem:[%s19] ss:$2 sm:$0xff]
  %s21 = scalar_lea.vmem %s0, 64
  %v22 = vld [vmem:[%s21] ss:$2 sm:$0xff]
  %s23 = scalar_lea.vmem %s0, 96
  %v24 = vld [vmem:[%s23] ss:$2 sm:$0xff]
  %s25 = scalar_lea.vmem %s0, 128
  %v26 = vld [vmem:[%s25] ss:$2 sm:$0xff]
  %s27 = scalar_lea.vmem %s0, 160
  %v28 = vld [vmem:[%s27] ss:$2 sm:$0xff]
  %s29 = scalar_lea.vmem %s0, 192
  %v30 = vld [vmem:[%s29] ss:$2 sm:$0xff]
  %s31 = scalar_lea.vmem %s0, 224
  %v32 = vld [vmem:[%s31] ss:$2 sm:$0xff]
  %s33 = scalar_lea.vmem %s0, 256
  %v34 = vld [vmem:[%s33] ss:$2 sm:$0xff]
  %s35 = scalar_lea.vmem %s0, 288
  %v36 = vld [vmem:[%s35] ss:$2 sm:$0xff]
  %s37 = scalar_lea.vmem %s0, 320
  %v38 = vld [vmem:[%s37] ss:$2 sm:$0xff]
  %s39 = scalar_lea.vmem %s0, 352
  %v40 = vld [vmem:[%s39] ss:$2 sm:$0xff]
  %s41 = scalar_lea.vmem %s0, 384
  %v42 = vld [vmem:[%s41] ss:$2 sm:$0xff]
  %s43 = scalar_lea.vmem %s0, 416
  %v44 = vld [vmem:[%s43] ss:$2 sm:$0xff]
  %s45 = scalar_lea.vmem %s0, 448
  %v46 = vld [vmem:[%s45] ss:$2 sm:$0xff]
  %s47 = scalar_lea.vmem %s0, 480
  %v48 = vld [vmem:[%s47] ss:$2 sm:$0xff]
  %s49 = scalar_lea.vmem %s0, 1
  %v50 = vld [vmem:[%s49] ss:$2 sm:$0xff]
  %s51 = scalar_lea.vmem %s0, 33
  %v52 = vld [vmem:[%s51] ss:$2 sm:$0xff]
  %s53 = scalar_lea.vmem %s0, 65
  %v54 = vld [vmem:[%s53] ss:$2 sm:$0xff]
  %s55 = scalar_lea.vmem %s0, 97
  %v56 = vld [vmem:[%s55] ss:$2 sm:$0xff]
  %s57 = scalar_lea.vmem %s0, 129
  %v58 = vld [vmem:[%s57] ss:$2 sm:$0xff]
  %s59 = scalar_lea.vmem %s0, 161
  %v60 = vld [vmem:[%s59] ss:$2 sm:$0xff]
  %s61 = scalar_lea.vmem %s0, 193
  %v62 = vld [vmem:[%s61] ss:$2 sm:$0xff]
  %s63 = scalar_lea.vmem %s0, 225
  %v64 = vld [vmem:[%s63] ss:$2 sm:$0xff]
  %s65 = scalar_lea.vmem %s0, 257
  %v66 = vld [vmem:[%s65] ss:$2 sm:$0xff]
  %s67 = scalar_lea.vmem %s0, 289
  %v68 = vld [vmem:[%s67] ss:$2 sm:$0xff]
  %s69 = scalar_lea.vmem %s0, 321
  %v70 = vld [vmem:[%s69] ss:$2 sm:$0xff]
  %s71 = scalar_lea.vmem %s0, 353
  %v72 = vld [vmem:[%s71] ss:$2 sm:$0xff]
  %s73 = scalar_lea.vmem %s0, 385
  %v74 = vld [vmem:[%s73] ss:$2 sm:$0xff]
  %s75 = scalar_lea.vmem %s0, 417
  %v76 = vld [vmem:[%s75] ss:$2 sm:$0xff]
  %s77 = scalar_lea.vmem %s0, 449
  %v78 = vld [vmem:[%s77] ss:$2 sm:$0xff]
  %s79 = scalar_lea.vmem %s0, 481
  %v80 = vld [vmem:[%s79] ss:$2 sm:$0xff]
  %s81 = scalar_lea.vmem %s0, 16
  %v82 = vld [vmem:[%s81] ss:$2 sm:$0xff]
  %s83 = scalar_lea.vmem %s81, 32
  %v84 = vld [vmem:[%s83] ss:$2 sm:$0xff]
  %s85 = scalar_lea.vmem %s81, 64
  %v86 = vld [vmem:[%s85] ss:$2 sm:$0xff]
  %s87 = scalar_lea.vmem %s81, 96
  %v88 = vld [vmem:[%s87] ss:$2 sm:$0xff]
  %s89 = scalar_lea.vmem %s81, 128
  %v90 = vld [vmem:[%s89] ss:$2 sm:$0xff]
  %s91 = scalar_lea.vmem %s81, 160
  %v92 = vld [vmem:[%s91] ss:$2 sm:$0xff]
  %s93 = scalar_lea.vmem %s81, 192
  %v94 = vld [vmem:[%s93] ss:$2 sm:$0xff]
  %s95 = scalar_lea.vmem %s81, 224
  %v96 = vld [vmem:[%s95] ss:$2 sm:$0xff]
  %s97 = scalar_lea.vmem %s81, 256
  %v98 = vld [vmem:[%s97] ss:$2 sm:$0xff]
  %s99 = scalar_lea.vmem %s81, 288
  %v100 = vld [vmem:[%s99] ss:$2 sm:$0xff]
  %s101 = scalar_lea.vmem %s81, 320
  %v102 = vld [vmem:[%s101] ss:$2 sm:$0xff]
  %s103 = scalar_lea.vmem %s81, 352
  %v104 = vld [vmem:[%s103] ss:$2 sm:$0xff]
  %s105 = scalar_lea.vmem %s81, 384
  %v106 = vld [vmem:[%s105] ss:$2 sm:$0xff]
  %s107 = scalar_lea.vmem %s81, 416
  %v108 = vld [vmem:[%s107] ss:$2 sm:$0xff]
  %s109 = scalar_lea.vmem %s81, 448
  %v110 = vld [vmem:[%s109] ss:$2 sm:$0xff]
  %s111 = scalar_lea.vmem %s81, 480
  %v112 = vld [vmem:[%s111] ss:$2 sm:$0xff]
  %s113 = scalar_lea.vmem %s81, 1
  %v114 = vld [vmem:[%s113] ss:$2 sm:$0xff]
  %s115 = scalar_lea.vmem %s81, 33
  %v116 = vld [vmem:[%s115] ss:$2 sm:$0xff]
  %s117 = scalar_lea.vmem %s81, 65
  %v118 = vld [vmem:[%s117] ss:$2 sm:$0xff]
  %s119 = scalar_lea.vmem %s81, 97
  %v120 = vld [vmem:[%s119] ss:$2 sm:$0xff]
  %s121 = scalar_lea.vmem %s81, 129
  %v122 = vld [vmem:[%s121] ss:$2 sm:$0xff]
  %s123 = scalar_lea.vmem %s81, 161
  %v124 = vld [vmem:[%s123] ss:$2 sm:$0xff]
  %s125 = scalar_lea.vmem %s81, 193
  %v126 = vld [vmem:[%s125] ss:$2 sm:$0xff]
  %s127 = scalar_lea.vmem %s81, 225
  %v128 = vld [vmem:[%s127] ss:$2 sm:$0xff]
  %s129 = scalar_lea.vmem %s81, 257
  %v130 = vld [vmem:[%s129] ss:$2 sm:$0xff]
  %s131 = scalar_lea.vmem %s81, 289
  %v132 = vld [vmem:[%s131] ss:$2 sm:$0xff]
  %s133 = scalar_lea.vmem %s81, 321
  %v134 = vld [vmem:[%s133] ss:$2 sm:$0xff]
  %s135 = scalar_lea.vmem %s81, 353
  %v136 = vld [vmem:[%s135] ss:$2 sm:$0xff]
  %s137 = scalar_lea.vmem %s81, 385
  %v138 = vld [vmem:[%s137] ss:$2 sm:$0xff]
  %s139 = scalar_lea.vmem %s81, 417
  %v140 = vld [vmem:[%s139] ss:$2 sm:$0xff]
  %s141 = scalar_lea.vmem %s81, 449
  %v142 = vld [vmem:[%s141] ss:$2 sm:$0xff]
  %s143 = scalar_lea.vmem %s81, 481
  %v144 = vld [vmem:[%s143] ss:$2 sm:$0xff]
  %v145 = vmax.f32 %v18, %v50
  %v146 = vmax.f32 %v20, %v52
  %v147 = vmax.f32 %v22, %v54
  %v148 = vmax.f32 %v24, %v56
  %v149 = vmax.f32 %v26, %v58
  %v150 = vmax.f32 %v28, %v60
  %v151 = vmax.f32 %v30, %v62
  %v152 = vmax.f32 %v32, %v64
  %v153 = vmax.f32 %v34, %v66
  %v154 = vmax.f32 %v36, %v68
  %v155 = vmax.f32 %v38, %v70
  %v156 = vmax.f32 %v40, %v72
  %v157 = vmax.f32 %v42, %v74
  %v158 = vmax.f32 %v44, %v76
  %v159 = vmax.f32 %v46, %v78
  %v160 = vmax.f32 %v48, %v80
  %v161 = vmax.f32 %v82, %v114
  %v162 = vmax.f32 %v84, %v116
  %v163 = vmax.f32 %v86, %v118
  %v164 = vmax.f32 %v88, %v120
  %v165 = vmax.f32 %v90, %v122
  %v166 = vmax.f32 %v92, %v124
  %v167 = vmax.f32 %v94, %v126
  %v168 = vmax.f32 %v96, %v128
  %v169 = vmax.f32 %v98, %v130
  %v170 = vmax.f32 %v100, %v132
  %v171 = vmax.f32 %v102, %v134
  %v172 = vmax.f32 %v104, %v136
  %v173 = vmax.f32 %v106, %v138
  %v174 = vmax.f32 %v108, %v140
  %v175 = vmax.f32 %v110, %v142
  %v176 = vmax.f32 %v112, %v144
  %v177 = vmax.f32 %v145, %v161
  %v178 = vmax.f32 %v146, %v162
  %v179 = vmax.f32 %v147, %v163
  %v180 = vmax.f32 %v148, %v164
  %v181 = vmax.f32 %v149, %v165
  %v182 = vmax.f32 %v150, %v166
  %v183 = vmax.f32 %v151, %v167
  %v184 = vmax.f32 %v152, %v168
  %v185 = vmax.f32 %v153, %v169
  %v186 = vmax.f32 %v154, %v170
  %v187 = vmax.f32 %v155, %v171
  %v188 = vmax.f32 %v156, %v172
  %v189 = vmax.f32 %v157, %v173
  %v190 = vmax.f32 %v158, %v174
  %v191 = vmax.f32 %v159, %v175
  %v192 = vmax.f32 %v160, %v176
  %vm193 = vcmask 27648
  %194 = vst.msk [vmem:[#allocation2] sm:$0xf] %vm193, 0
  %vm195 = vcmask 24576
  %196 = vst.msk [vmem:[#allocation2 + $0x4] sm:$0x1] %vm195, 0
  %197 = vst.msk [vmem:[#allocation2 + $0x50] sm:$0xf] %vm193, 0
  %198 = vst.msk [vmem:[#allocation2 + $0x54] sm:$0x1] %vm195, 0
  %s199 = scalar_lea.vmem [#allocation2], 72
  %200 = vst.msk [vmem:[%s199] sm:$0xf] %vm193, 0
  %201 = vst.msk [vmem:[%s199 + $0x4] sm:$0x1] %vm195, 0
  %202 = vst.msk [vmem:[%s199 + $0x50] sm:$0xf] %vm193, 0
  %203 = vst.msk [vmem:[%s199 + $0x54] sm:$0x1] %vm195, 0
  %vm204 = vcmask 24576
  %vm205 = vsmask.f32 256
  %vm206 = vmand %vm204, %vm205
  %v207 = vld [vmem:[#allocation2] sm:$0x1]
  %v208 = vsel %vm206, 0, %v207
  %209 = vst [vmem:[#allocation2] sm:$0x1] %v208
  %v210 = vld [vmem:[#allocation2 + $0x8] sm:$0x1]
  %v211 = vsel %vm206, 0, %v210
  %212 = vst [vmem:[#allocation2 + $0x8] sm:$0x1] %v211
  %v213 = vld [vmem:[#allocation2 + $0x10] sm:$0x1]
  %v214 = vsel %vm206, 0, %v213
  %215 = vst [vmem:[#allocation2 + $0x10] sm:$0x1] %v214
  %v216 = vld [vmem:[#allocation2 + $0x18] sm:$0x1]
  %v217 = vsel %vm206, 0, %v216
  %218 = vst [vmem:[#allocation2 + $0x18] sm:$0x1] %v217
  %v219 = vld [vmem:[#allocation2 + $0x20] sm:$0x1]
  %v220 = vsel %vm206, 0, %v219
  %221 = vst [vmem:[#allocation2 + $0x20] sm:$0x1] %v220
  %v222 = vld [vmem:[#allocation2 + $0x28] sm:$0x1]
  %v223 = vsel %vm206, 0, %v222
  %224 = vst [vmem:[#allocation2 + $0x28] sm:$0x1] %v223
  %v225 = vld [vmem:[#allocation2 + $0x30] sm:$0x1]
  %v226 = vsel %vm206, 0, %v225
  %227 = vst [vmem:[#allocation2 + $0x30] sm:$0x1] %v226
  %v228 = vld [vmem:[#allocation2 + $0x38] sm:$0x1]
  %v229 = vsel %vm206, 0, %v228
  %230 = vst [vmem:[#allocation2 + $0x38] sm:$0x1] %v229
  %v231 = vld [vmem:[#allocation2 + $0x40] sm:$0x1]
  %v232 = vsel %vm206, 0, %v231
  %233 = vst [vmem:[#allocation2 + $0x40] sm:$0x1] %v232
  %v234 = vld [vmem:[#allocation2 + $0x48] sm:$0x1]
  %v235 = vsel %vm206, 0, %v234
  %236 = vst [vmem:[#allocation2 + $0x48] sm:$0x1] %v235
  %v237 = vld [vmem:[#allocation2 + $0x50] sm:$0x1]
  %v238 = vsel %vm206, 0, %v237
  %239 = vst [vmem:[#allocation2 + $0x50] sm:$0x1] %v238
  %v240 = vld [vmem:[#allocation2 + $0x58] sm:$0x1]
  %v241 = vsel %vm206, 0, %v240
  %242 = vst [vmem:[#allocation2 + $0x58] sm:$0x1] %v241
  %v243 = vld [vmem:[#allocation2 + $0x60] sm:$0x1]
  %v244 = vsel %vm206, 0, %v243
  %245 = vst [vmem:[#allocation2 + $0x60] sm:$0x1] %v244
  %v246 = vld [vmem:[#allocation2 + $0x68] sm:$0x1]
  %v247 = vsel %vm206, 0, %v246
  %248 = vst [vmem:[#allocation2 + $0x68] sm:$0x1] %v247
  %v249 = vld [vmem:[#allocation2 + $0x70] sm:$0x1]
  %v250 = vsel %vm206, 0, %v249
  %251 = vst [vmem:[#allocation2 + $0x70] sm:$0x1] %v250
  %v252 = vld [vmem:[#allocation2 + $0x78] sm:$0x1]
  %v253 = vsel %vm206, 0, %v252
  %254 = vst [vmem:[#allocation2 + $0x78] sm:$0x1] %v253
  %v255 = vld [vmem:[#allocation2 + $0x80] sm:$0x1]
  %v256 = vsel %vm206, 0, %v255
  %257 = vst [vmem:[#allocation2 + $0x80] sm:$0x1] %v256
  %v258 = vld [vmem:[#allocation2 + $0x88] sm:$0x1]
  %v259 = vsel %vm206, 0, %v258
  %260 = vst [vmem:[#allocation2 + $0x88] sm:$0x1] %v259
  %v261 = vld [vmem:[#allocation2 + $0x90] sm:$0x1]
  %v262 = vsel %vm206, 0, %v261
  %263 = vst [vmem:[#allocation2 + $0x90] sm:$0x1] %v262
  %v264 = vld [vmem:[#allocation2 + $0x98] sm:$0x1]
  %v265 = vsel %vm206, 0, %v264
  %266 = vst [vmem:[#allocation2 + $0x98] sm:$0x1] %v265
  %vm267 = vsmask.f32 7938
  %vm268 = vmand %vm204, %vm267
  %v269 = vld [vmem:[#allocation2 + $0x4] sm:$0x1]
  %v270 = vsel %vm268, 0, %v269
  %271 = vst [vmem:[#allocation2 + $0x4] sm:$0x1] %v270
  %v272 = vld [vmem:[#allocation2 + $0xc] sm:$0x1]
  %v273 = vsel %vm268, 0, %v272
  %274 = vst [vmem:[#allocation2 + $0xc] sm:$0x1] %v273
  %v275 = vld [vmem:[#allocation2 + $0x14] sm:$0x1]
  %v276 = vsel %vm268, 0, %v275
  %277 = vst [vmem:[#allocation2 + $0x14] sm:$0x1] %v276
  %v278 = vld [vmem:[#allocation2 + $0x1c] sm:$0x1]
  %v279 = vsel %vm268, 0, %v278
  %280 = vst [vmem:[#allocation2 + $0x1c] sm:$0x1] %v279
  %v281 = vld [vmem:[#allocation2 + $0x24] sm:$0x1]
  %v282 = vsel %vm268, 0, %v281
  %283 = vst [vmem:[#allocation2 + $0x24] sm:$0x1] %v282
  %v284 = vld [vmem:[#allocation2 + $0x2c] sm:$0x1]
  %v285 = vsel %vm268, 0, %v284
  %286 = vst [vmem:[#allocation2 + $0x2c] sm:$0x1] %v285
  %v287 = vld [vmem:[#allocation2 + $0x34] sm:$0x1]
  %v288 = vsel %vm268, 0, %v287
  %289 = vst [vmem:[#allocation2 + $0x34] sm:$0x1] %v288
  %v290 = vld [vmem:[#allocation2 + $0x3c] sm:$0x1]
  %v291 = vsel %vm268, 0, %v290
  %292 = vst [vmem:[#allocation2 + $0x3c] sm:$0x1] %v291
  %v293 = vld [vmem:[#allocation2 + $0x44] sm:$0x1]
  %v294 = vsel %vm268, 0, %v293
  %295 = vst [vmem:[#allocation2 + $0x44] sm:$0x1] %v294
  %v296 = vld [vmem:[#allocation2 + $0x4c] sm:$0x1]
  %v297 = vsel %vm268, 0, %v296
  %298 = vst [vmem:[#allocation2 + $0x4c] sm:$0x1] %v297
  %v299 = vld [vmem:[#allocation2 + $0x54] sm:$0x1]
  %v300 = vsel %vm268, 0, %v299
  %301 = vst [vmem:[#allocation2 + $0x54] sm:$0x1] %v300
  %v302 = vld [vmem:[#allocation2 + $0x5c] sm:$0x1]
  %v303 = vsel %vm268, 0, %v302
  %304 = vst [vmem:[#allocation2 + $0x5c] sm:$0x1] %v303
  %v305 = vld [vmem:[#allocation2 + $0x64] sm:$0x1]
  %v306 = vsel %vm268, 0, %v305
  %307 = vst [vmem:[#allocation2 + $0x64] sm:$0x1] %v306
  %v308 = vld [vmem:[#allocation2 + $0x6c] sm:$0x1]
  %v309 = vsel %vm268, 0, %v308
  %310 = vst [vmem:[#allocation2 + $0x6c] sm:$0x1] %v309
  %v311 = vld [vmem:[#allocation2 + $0x74] sm:$0x1]
  %v312 = vsel %vm268, 0, %v311
  %313 = vst [vmem:[#allocation2 + $0x74] sm:$0x1] %v312
  %v314 = vld [vmem:[#allocation2 + $0x7c] sm:$0x1]
  %v315 = vsel %vm268, 0, %v314
  %316 = vst [vmem:[#allocation2 + $0x7c] sm:$0x1] %v315
  %v317 = vld [vmem:[#allocation2 + $0x84] sm:$0x1]
  %v318 = vsel %vm268, 0, %v317
  %319 = vst [vmem:[#allocation2 + $0x84] sm:$0x1] %v318
  %v320 = vld [vmem:[#allocation2 + $0x8c] sm:$0x1]
  %v321 = vsel %vm268, 0, %v320
  %322 = vst [vmem:[#allocation2 + $0x8c] sm:$0x1] %v321
  %v323 = vld [vmem:[#allocation2 + $0x94] sm:$0x1]
  %v324 = vsel %vm268, 0, %v323
  %325 = vst [vmem:[#allocation2 + $0x94] sm:$0x1] %v324
  %v326 = vld [vmem:[#allocation2 + $0x9c] sm:$0x1]
  %v327 = vsel %vm268, 0, %v326
  %328 = vst [vmem:[#allocation2 + $0x9c] sm:$0x1] %v327
  %v329 = vpack.c.bf16 %v177, %v177
  %v330 = vpack.c.bf16 %v178, %v178
  %v331 = vpack.c.bf16 %v179, %v179
  %v332 = vpack.c.bf16 %v180, %v180
  %v333 = vpack.c.bf16 %v181, %v181
  %v334 = vpack.c.bf16 %v182, %v182
  %v335 = vpack.c.bf16 %v183, %v183
  %v336 = vpack.c.bf16 %v184, %v184
  %v337 = vpack.c.bf16 %v185, %v185
  %v338 = vpack.c.bf16 %v186, %v186
  %v339 = vpack.c.bf16 %v187, %v187
  %v340 = vpack.c.bf16 %v188, %v188
  %v341 = vpack.c.bf16 %v189, %v189
  %v342 = vpack.c.bf16 %v190, %v190
  %v343 = vpack.c.bf16 %v191, %v191
  %v344 = vpack.c.bf16 %v192, %v192
  %v361 = vunpack.c.l.b16 %v329
  %v362 = vunpack.c.l.b16 %v330
  %v363 = vunpack.c.l.b16 %v331
  %v364 = vunpack.c.l.b16 %v332
  %v365 = vunpack.c.l.b16 %v333
  %v366 = vunpack.c.l.b16 %v334
  %v367 = vunpack.c.l.b16 %v335
  %v368 = vunpack.c.l.b16 %v336
  %v369 = vunpack.c.l.b16 %v337
  %v370 = vunpack.c.l.b16 %v338
  %v371 = vunpack.c.l.b16 %v339
  %v372 = vunpack.c.l.b16 %v340
  %v373 = vunpack.c.l.b16 %v341
  %v374 = vunpack.c.l.b16 %v342
  %v375 = vunpack.c.l.b16 %v343
  %v376 = vunpack.c.l.b16 %v344
  %v377 = vpack.c.b16 %v361, %v361
  %v378 = vpack.c.b16 %v362, %v362
  %v379 = vpack.c.b16 %v363, %v363
  %v380 = vpack.c.b16 %v364, %v364
  %v381 = vpack.c.b16 %v365, %v365
  %v382 = vpack.c.b16 %v366, %v366
  %v383 = vpack.c.b16 %v367, %v367
  %v384 = vpack.c.b16 %v368, %v368
  %v385 = vpack.c.b16 %v369, %v369
  %v386 = vpack.c.b16 %v370, %v370
  %v387 = vpack.c.b16 %v371, %v371
  %v388 = vpack.c.b16 %v372, %v372
  %v389 = vpack.c.b16 %v373, %v373
  %v390 = vpack.c.b16 %v374, %v374
  %v391 = vpack.c.b16 %v375, %v375
  %v392 = vpack.c.b16 %v376, %v376
  %v394 = vshrl.u32 %v377, 16
  %v396 = vrot.slane %v394, 7
  %v397 = vshll.u32 %v377, 16
  %v399 = vor.u32 %v396, %v397
  %v400 = vrot.slane %v396, 4
  %v402 = vshrl.u32 %v378, 16
  %v404 = vrot.slane %v402, 7
  %v405 = vshll.u32 %v378, 16
  %v407 = vor.u32 %v404, %v405
  %v408 = vrot.slane %v404, 4
  %v410 = vshrl.u32 %v379, 16
  %v412 = vrot.slane %v410, 7
  %v413 = vshll.u32 %v379, 16
  %v415 = vor.u32 %v412, %v413
  %v416 = vrot.slane %v412, 4
  %v418 = vshrl.u32 %v380, 16
  %v420 = vrot.slane %v418, 7
  %v421 = vshll.u32 %v380, 16
  %v423 = vor.u32 %v420, %v421
  %v424 = vrot.slane %v420, 4
  %v426 = vshrl.u32 %v381, 16
  %v428 = vrot.slane %v426, 7
  %v429 = vshll.u32 %v381, 16
  %v431 = vor.u32 %v428, %v429
  %v432 = vrot.slane %v428, 4
  %v434 = vshrl.u32 %v382, 16
  %v436 = vrot.slane %v434, 7
  %v437 = vshll.u32 %v382, 16
  %v439 = vor.u32 %v436, %v437
  %v440 = vrot.slane %v436, 4
  %v442 = vshrl.u32 %v383, 16
  %v444 = vrot.slane %v442, 7
  %v445 = vshll.u32 %v383, 16
  %v447 = vor.u32 %v444, %v445
  %v448 = vrot.slane %v444, 4
  %v450 = vshrl.u32 %v384, 16
  %v452 = vrot.slane %v450, 7
  %v453 = vshll.u32 %v384, 16
  %v455 = vor.u32 %v452, %v453
  %v456 = vrot.slane %v452, 4
  %v458 = vshrl.u32 %v385, 16
  %v460 = vrot.slane %v458, 7
  %v461 = vshll.u32 %v385, 16
  %v463 = vor.u32 %v460, %v461
  %v464 = vrot.slane %v460, 4
  %v466 = vshrl.u32 %v386, 16
  %v468 = vrot.slane %v466, 7
  %v469 = vshll.u32 %v386, 16
  %v471 = vor.u32 %v468, %v469
  %v472 = vrot.slane %v468, 4
  %v474 = vshrl.u32 %v387, 16
  %v476 = vrot.slane %v474, 7
  %v477 = vshll.u32 %v387, 16
  %v479 = vor.u32 %v476, %v477
  %v480 = vrot.slane %v476, 4
  %v482 = vshrl.u32 %v388, 16
  %v484 = vrot.slane %v482, 7
  %v485 = vshll.u32 %v388, 16
  %v487 = vor.u32 %v484, %v485
  %v488 = vrot.slane %v484, 4
  %v490 = vshrl.u32 %v389, 16
  %v492 = vrot.slane %v490, 7
  %v493 = vshll.u32 %v389, 16
  %v495 = vor.u32 %v492, %v493
  %v496 = vrot.slane %v492, 4
  %v498 = vshrl.u32 %v390, 16
  %v500 = vrot.slane %v498, 7
  %v501 = vshll.u32 %v390, 16
  %v503 = vor.u32 %v500, %v501
  %v504 = vrot.slane %v500, 4
  %v506 = vshrl.u32 %v391, 16
  %v508 = vrot.slane %v506, 7
  %v509 = vshll.u32 %v391, 16
  %v511 = vor.u32 %v508, %v509
  %v512 = vrot.slane %v508, 4
  %v514 = vshrl.u32 %v392, 16
  %v516 = vrot.slane %v514, 7
  %v517 = vshll.u32 %v392, 16
  %v519 = vor.u32 %v516, %v517
  %v520 = vrot.slane %v516, 4
  %s553 = scalar_lea.vmem [#allocation2], 8
  %vm554 = vcmask 27648
  %vm555 = vmand %vm554, %vm267
  %v556 = vld [vmem:[%s553] sm:$0xf]
  %v557 = vsel %vm555, %v399, %v556
  %558 = vst [vmem:[%s553] sm:$0xf] %v557
  %v559 = vld [vmem:[%s553 + $0x4] sm:$0x1]
  %v560 = vsel %vm206, %v400, %v559
  %561 = vst [vmem:[%s553 + $0x4] sm:$0x1] %v560
  %v562 = vld [vmem:[%s553 + $0x8] sm:$0xf]
  %v563 = vsel %vm555, %v407, %v562
  %564 = vst [vmem:[%s553 + $0x8] sm:$0xf] %v563
  %v565 = vld [vmem:[%s553 + $0xc] sm:$0x1]
  %v566 = vsel %vm206, %v408, %v565
  %567 = vst [vmem:[%s553 + $0xc] sm:$0x1] %v566
  %v568 = vld [vmem:[%s553 + $0x10] sm:$0xf]
  %v569 = vsel %vm555, %v415, %v568
  %570 = vst [vmem:[%s553 + $0x10] sm:$0xf] %v569
  %v571 = vld [vmem:[%s553 + $0x14] sm:$0x1]
  %v572 = vsel %vm206, %v416, %v571
  %573 = vst [vmem:[%s553 + $0x14] sm:$0x1] %v572
  %v574 = vld [vmem:[%s553 + $0x18] sm:$0xf]
  %v575 = vsel %vm555, %v423, %v574
  %576 = vst [vmem:[%s553 + $0x18] sm:$0xf] %v575
  %v577 = vld [vmem:[%s553 + $0x1c] sm:$0x1]
  %v578 = vsel %vm206, %v424, %v577
  %579 = vst [vmem:[%s553 + $0x1c] sm:$0x1] %v578
  %v580 = vld [vmem:[%s553 + $0x20] sm:$0xf]
  %v581 = vsel %vm555, %v431, %v580
  %582 = vst [vmem:[%s553 + $0x20] sm:$0xf] %v581
  %v583 = vld [vmem:[%s553 + $0x24] sm:$0x1]
  %v584 = vsel %vm206, %v432, %v583
  %585 = vst [vmem:[%s553 + $0x24] sm:$0x1] %v584
  %v586 = vld [vmem:[%s553 + $0x28] sm:$0xf]
  %v587 = vsel %vm555, %v439, %v586
  %588 = vst [vmem:[%s553 + $0x28] sm:$0xf] %v587
  %v589 = vld [vmem:[%s553 + $0x2c] sm:$0x1]
  %v590 = vsel %vm206, %v440, %v589
  %591 = vst [vmem:[%s553 + $0x2c] sm:$0x1] %v590
  %v592 = vld [vmem:[%s553 + $0x30] sm:$0xf]
  %v593 = vsel %vm555, %v447, %v592
  %594 = vst [vmem:[%s553 + $0x30] sm:$0xf] %v593
  %v595 = vld [vmem:[%s553 + $0x34] sm:$0x1]
  %v596 = vsel %vm206, %v448, %v595
  %597 = vst [vmem:[%s553 + $0x34] sm:$0x1] %v596
  %v598 = vld [vmem:[%s553 + $0x38] sm:$0xf]
  %v599 = vsel %vm555, %v455, %v598
  %600 = vst [vmem:[%s553 + $0x38] sm:$0xf] %v599
  %v601 = vld [vmem:[%s553 + $0x3c] sm:$0x1]
  %v602 = vsel %vm206, %v456, %v601
  %603 = vst [vmem:[%s553 + $0x3c] sm:$0x1] %v602
  %v604 = vld [vmem:[%s553 + $0x50] sm:$0xf]
  %v605 = vsel %vm555, %v463, %v604
  %606 = vst [vmem:[%s553 + $0x50] sm:$0xf] %v605
  %v607 = vld [vmem:[%s553 + $0x54] sm:$0x1]
  %v608 = vsel %vm206, %v464, %v607
  %609 = vst [vmem:[%s553 + $0x54] sm:$0x1] %v608
  %v610 = vld [vmem:[%s553 + $0x58] sm:$0xf]
  %v611 = vsel %vm555, %v471, %v610
  %612 = vst [vmem:[%s553 + $0x58] sm:$0xf] %v611
  %v613 = vld [vmem:[%s553 + $0x5c] sm:$0x1]
  %v614 = vsel %vm206, %v472, %v613
  %615 = vst [vmem:[%s553 + $0x5c] sm:$0x1] %v614
  %v616 = vld [vmem:[%s553 + $0x60] sm:$0xf]
  %v617 = vsel %vm555, %v479, %v616
  %618 = vst [vmem:[%s553 + $0x60] sm:$0xf] %v617
  %v619 = vld [vmem:[%s553 + $0x64] sm:$0x1]
  %v620 = vsel %vm206, %v480, %v619
  %621 = vst [vmem:[%s553 + $0x64] sm:$0x1] %v620
  %v622 = vld [vmem:[%s553 + $0x68] sm:$0xf]
  %v623 = vsel %vm555, %v487, %v622
  %624 = vst [vmem:[%s553 + $0x68] sm:$0xf] %v623
  %v625 = vld [vmem:[%s553 + $0x6c] sm:$0x1]
  %v626 = vsel %vm206, %v488, %v625
  %627 = vst [vmem:[%s553 + $0x6c] sm:$0x1] %v626
  %v628 = vld [vmem:[%s553 + $0x70] sm:$0xf]
  %v629 = vsel %vm555, %v495, %v628
  %630 = vst [vmem:[%s553 + $0x70] sm:$0xf] %v629
  %v631 = vld [vmem:[%s553 + $0x74] sm:$0x1]
  %v632 = vsel %vm206, %v496, %v631
  %633 = vst [vmem:[%s553 + $0x74] sm:$0x1] %v632
  %v634 = vld [vmem:[%s553 + $0x78] sm:$0xf]
  %v635 = vsel %vm555, %v503, %v634
  %636 = vst [vmem:[%s553 + $0x78] sm:$0xf] %v635
  %v637 = vld [vmem:[%s553 + $0x7c] sm:$0x1]
  %v638 = vsel %vm206, %v504, %v637
  %639 = vst [vmem:[%s553 + $0x7c] sm:$0x1] %v638
  %v640 = vld [vmem:[%s553 + $0x80] sm:$0xf]
  %v641 = vsel %vm555, %v511, %v640
  %642 = vst [vmem:[%s553 + $0x80] sm:$0xf] %v641
  %v643 = vld [vmem:[%s553 + $0x84] sm:$0x1]
  %v644 = vsel %vm206, %v512, %v643
  %645 = vst [vmem:[%s553 + $0x84] sm:$0x1] %v644
  %v646 = vld [vmem:[%s553 + $0x88] sm:$0xf]
  %v647 = vsel %vm555, %v519, %v646
  %648 = vst [vmem:[%s553 + $0x88] sm:$0xf] %v647
  %v649 = vld [vmem:[%s553 + $0x8c] sm:$0x1]
  %v650 = vsel %vm206, %v520, %v649
  %651 = vst [vmem:[%s553 + $0x8c] sm:$0x1] %v650
  %v652 = vld [vmem:[#allocation2] sm:$0xf]
  %v653 = vld [vmem:[#allocation2 + $0x8] sm:$0xf]
  %v654 = vld [vmem:[#allocation2 + $0x10] sm:$0xf]
  %v655 = vld [vmem:[#allocation2 + $0x18] sm:$0xf]
  %v656 = vld [vmem:[#allocation2 + $0x20] sm:$0xf]
  %v657 = vld [vmem:[#allocation2 + $0x28] sm:$0xf]
  %v658 = vld [vmem:[#allocation2 + $0x30] sm:$0xf]
  %v659 = vld [vmem:[#allocation2 + $0x38] sm:$0xf]
  %v660 = vld [vmem:[#allocation2 + $0x50] sm:$0xf]
  %v661 = vld [vmem:[#allocation2 + $0x58] sm:$0xf]
  %v662 = vld [vmem:[#allocation2 + $0x60] sm:$0xf]
  %v663 = vld [vmem:[#allocation2 + $0x68] sm:$0xf]
  %v664 = vld [vmem:[#allocation2 + $0x70] sm:$0xf]
  %v665 = vld [vmem:[#allocation2 + $0x78] sm:$0xf]
  %v666 = vld [vmem:[#allocation2 + $0x80] sm:$0xf]
  %v667 = vld [vmem:[#allocation2 + $0x88] sm:$0xf]
  %v668 = vld [vmem:[#allocation2 + $0x4] sm:$0x1]
  %v669 = vld [vmem:[#allocation2 + $0xc] sm:$0x1]
  %v670 = vld [vmem:[#allocation2 + $0x14] sm:$0x1]
  %v671 = vld [vmem:[#allocation2 + $0x1c] sm:$0x1]
  %v672 = vld [vmem:[#allocation2 + $0x24] sm:$0x1]
  %v673 = vld [vmem:[#allocation2 + $0x2c] sm:$0x1]
  %v674 = vld [vmem:[#allocation2 + $0x34] sm:$0x1]
  %v675 = vld [vmem:[#allocation2 + $0x3c] sm:$0x1]
  %v676 = vld [vmem:[#allocation2 + $0x54] sm:$0x1]
  %v677 = vld [vmem:[#allocation2 + $0x5c] sm:$0x1]
  %v678 = vld [vmem:[#allocation2 + $0x64] sm:$0x1]
  %v679 = vld [vmem:[#allocation2 + $0x6c] sm:$0x1]
  %v680 = vld [vmem:[#allocation2 + $0x74] sm:$0x1]
  %v681 = vld [vmem:[#allocation2 + $0x7c] sm:$0x1]
  %v682 = vld [vmem:[#allocation2 + $0x84] sm:$0x1]
  %v683 = vld [vmem:[#allocation2 + $0x8c] sm:$0x1]
  %v684 = vld [vmem:[#allocation2] sm:$0xe]
  %v685 = vld [vmem:[#allocation2 + $0x8] sm:$0xe]
  %v686 = vld [vmem:[#allocation2 + $0x10] sm:$0xe]
  %v687 = vld [vmem:[#allocation2 + $0x18] sm:$0xe]
  %v688 = vld [vmem:[#allocation2 + $0x20] sm:$0xe]
  %v689 = vld [vmem:[#allocation2 + $0x28] sm:$0xe]
  %v690 = vld [vmem:[#allocation2 + $0x30] sm:$0xe]
  %v691 = vld [vmem:[#allocation2 + $0x38] sm:$0xe]
  %v692 = vld [vmem:[#allocation2 + $0x50] sm:$0xe]
  %v693 = vld [vmem:[#allocation2 + $0x58] sm:$0xe]
  %v694 = vld [vmem:[#allocation2 + $0x60] sm:$0xe]
  %v695 = vld [vmem:[#allocation2 + $0x68] sm:$0xe]
  %v696 = vld [vmem:[#allocation2 + $0x70] sm:$0xe]
  %v697 = vld [vmem:[#allocation2 + $0x78] sm:$0xe]
  %v698 = vld [vmem:[#allocation2 + $0x80] sm:$0xe]
  %v699 = vld [vmem:[#allocation2 + $0x88] sm:$0xe]
  %v700 = vld [vmem:[%s553] sm:$0xf]
  %v701 = vld [vmem:[%s553 + $0x8] sm:$0xf]
  %v702 = vld [vmem:[%s553 + $0x10] sm:$0xf]
  %v703 = vld [vmem:[%s553 + $0x18] sm:$0xf]
  %v704 = vld [vmem:[%s553 + $0x20] sm:$0xf]
  %v705 = vld [vmem:[%s553 + $0x28] sm:$0xf]
  %v706 = vld [vmem:[%s553 + $0x30] sm:$0xf]
  %v707 = vld [vmem:[%s553 + $0x38] sm:$0xf]
  %v708 = vld [vmem:[%s553 + $0x50] sm:$0xf]
  %v709 = vld [vmem:[%s553 + $0x58] sm:$0xf]
  %v710 = vld [vmem:[%s553 + $0x60] sm:$0xf]
  %v711 = vld [vmem:[%s553 + $0x68] sm:$0xf]
  %v712 = vld [vmem:[%s553 + $0x70] sm:$0xf]
  %v713 = vld [vmem:[%s553 + $0x78] sm:$0xf]
  %v714 = vld [vmem:[%s553 + $0x80] sm:$0xf]
  %v715 = vld [vmem:[%s553 + $0x88] sm:$0xf]
  %v716 = vld [vmem:[%s553 + $0x4] sm:$0x1]
  %v717 = vld [vmem:[%s553 + $0xc] sm:$0x1]
  %v718 = vld [vmem:[%s553 + $0x14] sm:$0x1]
  %v719 = vld [vmem:[%s553 + $0x1c] sm:$0x1]
  %v720 = vld [vmem:[%s553 + $0x24] sm:$0x1]
  %v721 = vld [vmem:[%s553 + $0x2c] sm:$0x1]
  %v722 = vld [vmem:[%s553 + $0x34] sm:$0x1]
  %v723 = vld [vmem:[%s553 + $0x3c] sm:$0x1]
  %v724 = vld [vmem:[%s553 + $0x54] sm:$0x1]
  %v725 = vld [vmem:[%s553 + $0x5c] sm:$0x1]
  %v726 = vld [vmem:[%s553 + $0x64] sm:$0x1]
  %v727 = vld [vmem:[%s553 + $0x6c] sm:$0x1]
  %v728 = vld [vmem:[%s553 + $0x74] sm:$0x1]
  %v729 = vld [vmem:[%s553 + $0x7c] sm:$0x1]
  %v730 = vld [vmem:[%s553 + $0x84] sm:$0x1]
  %v731 = vld [vmem:[%s553 + $0x8c] sm:$0x1]
  %v732 = vld [vmem:[%s553] sm:$0xe]
  %v733 = vld [vmem:[%s553 + $0x8] sm:$0xe]
  %v734 = vld [vmem:[%s553 + $0x10] sm:$0xe]
  %v735 = vld [vmem:[%s553 + $0x18] sm:$0xe]
  %v736 = vld [vmem:[%s553 + $0x20] sm:$0xe]
  %v737 = vld [vmem:[%s553 + $0x28] sm:$0xe]
  %v738 = vld [vmem:[%s553 + $0x30] sm:$0xe]
  %v739 = vld [vmem:[%s553 + $0x38] sm:$0xe]
  %v740 = vld [vmem:[%s553 + $0x50] sm:$0xe]
  %v741 = vld [vmem:[%s553 + $0x58] sm:$0xe]
  %v742 = vld [vmem:[%s553 + $0x60] sm:$0xe]
  %v743 = vld [vmem:[%s553 + $0x68] sm:$0xe]
  %v744 = vld [vmem:[%s553 + $0x70] sm:$0xe]
  %v745 = vld [vmem:[%s553 + $0x78] sm:$0xe]
  %v746 = vld [vmem:[%s553 + $0x80] sm:$0xe]
  %v747 = vld [vmem:[%s553 + $0x88] sm:$0xe]
  %s748 = scalar_lea.vmem [#allocation2], 16
  %v749 = vld [vmem:[%s748] sm:$0xf]
  %v750 = vld [vmem:[%s748 + $0x8] sm:$0xf]
  %v751 = vld [vmem:[%s748 + $0x10] sm:$0xf]
  %v752 = vld [vmem:[%s748 + $0x18] sm:$0xf]
  %v753 = vld [vmem:[%s748 + $0x20] sm:$0xf]
  %v754 = vld [vmem:[%s748 + $0x28] sm:$0xf]
  %v755 = vld [vmem:[%s748 + $0x30] sm:$0xf]
  %v756 = vld [vmem:[%s748 + $0x38] sm:$0xf]
  %v757 = vld [vmem:[%s748 + $0x50] sm:$0xf]
  %v758 = vld [vmem:[%s748 + $0x58] sm:$0xf]
  %v759 = vld [vmem:[%s748 + $0x60] sm:$0xf]
  %v760 = vld [vmem:[%s748 + $0x68] sm:$0xf]
  %v761 = vld [vmem:[%s748 + $0x70] sm:$0xf]
  %v762 = vld [vmem:[%s748 + $0x78] sm:$0xf]
  %v763 = vld [vmem:[%s748 + $0x80] sm:$0xf]
  %v764 = vld [vmem:[%s748 + $0x88] sm:$0xf]
  %v765 = vld [vmem:[%s748 + $0x4] sm:$0x1]
  %v766 = vld [vmem:[%s748 + $0xc] sm:$0x1]
  %v767 = vld [vmem:[%s748 + $0x14] sm:$0x1]
  %v768 = vld [vmem:[%s748 + $0x1c] sm:$0x1]
  %v769 = vld [vmem:[%s748 + $0x24] sm:$0x1]
  %v770 = vld [vmem:[%s748 + $0x2c] sm:$0x1]
  %v771 = vld [vmem:[%s748 + $0x34] sm:$0x1]
  %v772 = vld [vmem:[%s748 + $0x3c] sm:$0x1]
  %v773 = vld [vmem:[%s748 + $0x54] sm:$0x1]
  %v774 = vld [vmem:[%s748 + $0x5c] sm:$0x1]
  %v775 = vld [vmem:[%s748 + $0x64] sm:$0x1]
  %v776 = vld [vmem:[%s748 + $0x6c] sm:$0x1]
  %v777 = vld [vmem:[%s748 + $0x74] sm:$0x1]
  %v778 = vld [vmem:[%s748 + $0x7c] sm:$0x1]
  %v779 = vld [vmem:[%s748 + $0x84] sm:$0x1]
  %v780 = vld [vmem:[%s748 + $0x8c] sm:$0x1]
  %v781 = vld [vmem:[%s748] sm:$0xe]
  %v782 = vld [vmem:[%s748 + $0x8] sm:$0xe]
  %v783 = vld [vmem:[%s748 + $0x10] sm:$0xe]
  %v784 = vld [vmem:[%s748 + $0x18] sm:$0xe]
  %v785 = vld [vmem:[%s748 + $0x20] sm:$0xe]
  %v786 = vld [vmem:[%s748 + $0x28] sm:$0xe]
  %v787 = vld [vmem:[%s748 + $0x30] sm:$0xe]
  %v788 = vld [vmem:[%s748 + $0x38] sm:$0xe]
  %v789 = vld [vmem:[%s748 + $0x50] sm:$0xe]
  %v790 = vld [vmem:[%s748 + $0x58] sm:$0xe]
  %v791 = vld [vmem:[%s748 + $0x60] sm:$0xe]
  %v792 = vld [vmem:[%s748 + $0x68] sm:$0xe]
  %v793 = vld [vmem:[%s748 + $0x70] sm:$0xe]
  %v794 = vld [vmem:[%s748 + $0x78] sm:$0xe]
  %v795 = vld [vmem:[%s748 + $0x80] sm:$0xe]
  %v796 = vld [vmem:[%s748 + $0x88] sm:$0xe]
  %v829 = vunpack.c.l.b16 %v652
  %v830 = vunpack.c.l.b16 %v668
  %v831 = vunpack.c.l.b16 %v653
  %v832 = vunpack.c.l.b16 %v669
  %v833 = vunpack.c.l.b16 %v654
  %v834 = vunpack.c.l.b16 %v670
  %v835 = vunpack.c.l.b16 %v655
  %v836 = vunpack.c.l.b16 %v671
  %v837 = vunpack.c.l.b16 %v656
  %v838 = vunpack.c.l.b16 %v672
  %v839 = vunpack.c.l.b16 %v657
  %v840 = vunpack.c.l.b16 %v673
  %v841 = vunpack.c.l.b16 %v658
  %v842 = vunpack.c.l.b16 %v674
  %v843 = vunpack.c.l.b16 %v659
  %v844 = vunpack.c.l.b16 %v675
  %v845 = vunpack.c.l.b16 %v660
  %v846 = vunpack.c.l.b16 %v676
  %v847 = vunpack.c.l.b16 %v661
  %v848 = vunpack.c.l.b16 %v677
  %v849 = vunpack.c.l.b16 %v662
  %v850 = vunpack.c.l.b16 %v678
  %v851 = vunpack.c.l.b16 %v663
  %v852 = vunpack.c.l.b16 %v679
  %v853 = vunpack.c.l.b16 %v664
  %v854 = vunpack.c.l.b16 %v680
  %v855 = vunpack.c.l.b16 %v665
  %v856 = vunpack.c.l.b16 %v681
  %v857 = vunpack.c.l.b16 %v666
  %v858 = vunpack.c.l.b16 %v682
  %v859 = vunpack.c.l.b16 %v667
  %v860 = vunpack.c.l.b16 %v683
  %v861 = vpack.c.b16 %v830, %v829
  %v862 = vpack.c.b16 %v832, %v831
  %v863 = vpack.c.b16 %v834, %v833
  %v864 = vpack.c.b16 %v836, %v835
  %v865 = vpack.c.b16 %v838, %v837
  %v866 = vpack.c.b16 %v840, %v839
  %v867 = vpack.c.b16 %v842, %v841
  %v868 = vpack.c.b16 %v844, %v843
  %v869 = vpack.c.b16 %v846, %v845
  %v870 = vpack.c.b16 %v848, %v847
  %v871 = vpack.c.b16 %v850, %v849
  %v872 = vpack.c.b16 %v852, %v851
  %v873 = vpack.c.b16 %v854, %v853
  %v874 = vpack.c.b16 %v856, %v855
  %v875 = vpack.c.b16 %v858, %v857
  %v876 = vpack.c.b16 %v860, %v859
  %v878 = vshrl.u32 %v861, 16
  %v880 = vshll.u32 %v861, 16
  %v882 = vrot.slane %v880, 1
  %v883 = vor.u32 %v878, %v882
  %v885 = vshrl.u32 %v862, 16
  %v887 = vshll.u32 %v862, 16
  %v889 = vrot.slane %v887, 1
  %v890 = vor.u32 %v885, %v889
  %v892 = vshrl.u32 %v863, 16
  %v894 = vshll.u32 %v863, 16
  %v896 = vrot.slane %v894, 1
  %v897 = vor.u32 %v892, %v896
  %v899 = vshrl.u32 %v864, 16
  %v901 = vshll.u32 %v864, 16
  %v903 = vrot.slane %v901, 1
  %v904 = vor.u32 %v899, %v903
  %v906 = vshrl.u32 %v865, 16
  %v908 = vshll.u32 %v865, 16
  %v910 = vrot.slane %v908, 1
  %v911 = vor.u32 %v906, %v910
  %v913 = vshrl.u32 %v866, 16
  %v915 = vshll.u32 %v866, 16
  %v917 = vrot.slane %v915, 1
  %v918 = vor.u32 %v913, %v917
  %v920 = vshrl.u32 %v867, 16
  %v922 = vshll.u32 %v867, 16
  %v924 = vrot.slane %v922, 1
  %v925 = vor.u32 %v920, %v924
  %v927 = vshrl.u32 %v868, 16
  %v929 = vshll.u32 %v868, 16
  %v931 = vrot.slane %v929, 1
  %v932 = vor.u32 %v927, %v931
  %v934 = vshrl.u32 %v869, 16
  %v936 = vshll.u32 %v869, 16
  %v938 = vrot.slane %v936, 1
  %v939 = vor.u32 %v934, %v938
  %v941 = vshrl.u32 %v870, 16
  %v943 = vshll.u32 %v870, 16
  %v945 = vrot.slane %v943, 1
  %v946 = vor.u32 %v941, %v945
  %v948 = vshrl.u32 %v871, 16
  %v950 = vshll.u32 %v871, 16
  %v952 = vrot.slane %v950, 1
  %v953 = vor.u32 %v948, %v952
  %v955 = vshrl.u32 %v872, 16
  %v957 = vshll.u32 %v872, 16
  %v959 = vrot.slane %v957, 1
  %v960 = vor.u32 %v955, %v959
  %v962 = vshrl.u32 %v873, 16
  %v964 = vshll.u32 %v873, 16
  %v966 = vrot.slane %v964, 1
  %v967 = vor.u32 %v962, %v966
  %v969 = vshrl.u32 %v874, 16
  %v971 = vshll.u32 %v874, 16
  %v973 = vrot.slane %v971, 1
  %v974 = vor.u32 %v969, %v973
  %v976 = vshrl.u32 %v875, 16
  %v978 = vshll.u32 %v875, 16
  %v980 = vrot.slane %v978, 1
  %v981 = vor.u32 %v976, %v980
  %v983 = vshrl.u32 %v876, 16
  %v985 = vshll.u32 %v876, 16
  %v987 = vrot.slane %v985, 1
  %v988 = vor.u32 %v983, %v987
  %989 = vrot.lane.b32.xlu0 %v883, 4
  %v990 = vpop.permute.xlu0 %989
  %991 = vrot.lane.b32.xlu0 %v890, 4
  %v992 = vpop.permute.xlu0 %991
  %993 = vrot.lane.b32.xlu0 %v897, 4
  %v994 = vpop.permute.xlu0 %993
  %995 = vrot.lane.b32.xlu0 %v904, 4
  %v996 = vpop.permute.xlu0 %995
  %997 = vrot.lane.b32.xlu0 %v911, 4
  %v998 = vpop.permute.xlu0 %997
  %999 = vrot.lane.b32.xlu0 %v918, 4
  %v1000 = vpop.permute.xlu0 %999
  %1001 = vrot.lane.b32.xlu0 %v925, 4
  %v1002 = vpop.permute.xlu0 %1001
  %1003 = vrot.lane.b32.xlu0 %v932, 4
  %v1004 = vpop.permute.xlu0 %1003
  %1005 = vrot.lane.b32.xlu0 %v939, 4
  %v1006 = vpop.permute.xlu0 %1005
  %1007 = vrot.lane.b32.xlu0 %v946, 4
  %v1008 = vpop.permute.xlu0 %1007
  %1009 = vrot.lane.b32.xlu0 %v953, 4
  %v1010 = vpop.permute.xlu0 %1009
  %1011 = vrot.lane.b32.xlu0 %v960, 4
  %v1012 = vpop.permute.xlu0 %1011
  %1013 = vrot.lane.b32.xlu0 %v967, 4
  %v1014 = vpop.permute.xlu0 %1013
  %1015 = vrot.lane.b32.xlu0 %v974, 4
  %v1016 = vpop.permute.xlu0 %1015
  %1017 = vrot.lane.b32.xlu0 %v981, 4
  %v1018 = vpop.permute.xlu0 %1017
  %1019 = vrot.lane.b32.xlu0 %v988, 4
  %v1020 = vpop.permute.xlu0 %1019
  %v1037 = vunpack.c.l.b16 %v684
  %v1038 = vunpack.c.l.b16 %v685
  %v1039 = vunpack.c.l.b16 %v686
  %v1040 = vunpack.c.l.b16 %v687
  %v1041 = vunpack.c.l.b16 %v688
  %v1042 = vunpack.c.l.b16 %v689
  %v1043 = vunpack.c.l.b16 %v690
  %v1044 = vunpack.c.l.b16 %v691
  %v1045 = vunpack.c.l.b16 %v692
  %v1046 = vunpack.c.l.b16 %v693
  %v1047 = vunpack.c.l.b16 %v694
  %v1048 = vunpack.c.l.b16 %v695
  %v1049 = vunpack.c.l.b16 %v696
  %v1050 = vunpack.c.l.b16 %v697
  %v1051 = vunpack.c.l.b16 %v698
  %v1052 = vunpack.c.l.b16 %v699
  %v1053 = vpack.c.b16 %v830, %v1037
  %v1054 = vpack.c.b16 %v832, %v1038
  %v1055 = vpack.c.b16 %v834, %v1039
  %v1056 = vpack.c.b16 %v836, %v1040
  %v1057 = vpack.c.b16 %v838, %v1041
  %v1058 = vpack.c.b16 %v840, %v1042
  %v1059 = vpack.c.b16 %v842, %v1043
  %v1060 = vpack.c.b16 %v844, %v1044
  %v1061 = vpack.c.b16 %v846, %v1045
  %v1062 = vpack.c.b16 %v848, %v1046
  %v1063 = vpack.c.b16 %v850, %v1047
  %v1064 = vpack.c.b16 %v852, %v1048
  %v1065 = vpack.c.b16 %v854, %v1049
  %v1066 = vpack.c.b16 %v856, %v1050
  %v1067 = vpack.c.b16 %v858, %v1051
  %v1068 = vpack.c.b16 %v860, %v1052
  %v1069 = vrot.slane %v1053, 1
  %v1070 = vrot.slane %v1054, 1
  %v1071 = vrot.slane %v1055, 1
  %v1072 = vrot.slane %v1056, 1
  %v1073 = vrot.slane %v1057, 1
  %v1074 = vrot.slane %v1058, 1
  %v1075 = vrot.slane %v1059, 1
  %v1076 = vrot.slane %v1060, 1
  %v1077 = vrot.slane %v1061, 1
  %v1078 = vrot.slane %v1062, 1
  %v1079 = vrot.slane %v1063, 1
  %v1080 = vrot.slane %v1064, 1
  %v1081 = vrot.slane %v1065, 1
  %v1082 = vrot.slane %v1066, 1
  %v1083 = vrot.slane %v1067, 1
  %v1084 = vrot.slane %v1068, 1
  %1085 = vrot.lane.b32.xlu0 %v1069, 8
  %v1086 = vpop.permute.xlu0 %1085
  %1087 = vrot.lane.b32.xlu0 %v1070, 8
  %v1088 = vpop.permute.xlu0 %1087
  %1089 = vrot.lane.b32.xlu0 %v1071, 8
  %v1090 = vpop.permute.xlu0 %1089
  %1091 = vrot.lane.b32.xlu0 %v1072, 8
  %v1092 = vpop.permute.xlu0 %1091
  %1093 = vrot.lane.b32.xlu0 %v1073, 8
  %v1094 = vpop.permute.xlu0 %1093
  %1095 = vrot.lane.b32.xlu0 %v1074, 8
  %v1096 = vpop.permute.xlu0 %1095
  %1097 = vrot.lane.b32.xlu0 %v1075, 8
  %v1098 = vpop.permute.xlu0 %1097
  %1099 = vrot.lane.b32.xlu0 %v1076, 8
  %v1100 = vpop.permute.xlu0 %1099
  %1101 = vrot.lane.b32.xlu0 %v1077, 8
  %v1102 = vpop.permute.xlu0 %1101
  %1103 = vrot.lane.b32.xlu0 %v1078, 8
  %v1104 = vpop.permute.xlu0 %1103
  %1105 = vrot.lane.b32.xlu0 %v1079, 8
  %v1106 = vpop.permute.xlu0 %1105
  %1107 = vrot.lane.b32.xlu0 %v1080, 8
  %v1108 = vpop.permute.xlu0 %1107
  %1109 = vrot.lane.b32.xlu0 %v1081, 8
  %v1110 = vpop.permute.xlu0 %1109
  %1111 = vrot.lane.b32.xlu0 %v1082, 8
  %v1112 = vpop.permute.xlu0 %1111
  %1113 = vrot.lane.b32.xlu0 %v1083, 8
  %v1114 = vpop.permute.xlu0 %1113
  %1115 = vrot.lane.b32.xlu0 %v1084, 8
  %v1116 = vpop.permute.xlu0 %1115
  %v1133 = vunpack.c.l.b16 %v700
  %v1134 = vunpack.c.l.b16 %v701
  %v1135 = vunpack.c.l.b16 %v702
  %v1136 = vunpack.c.l.b16 %v703
  %v1137 = vunpack.c.l.b16 %v704
  %v1138 = vunpack.c.l.b16 %v705
  %v1139 = vunpack.c.l.b16 %v706
  %v1140 = vunpack.c.l.b16 %v707
  %v1141 = vunpack.c.l.b16 %v708
  %v1142 = vunpack.c.l.b16 %v709
  %v1143 = vunpack.c.l.b16 %v710
  %v1144 = vunpack.c.l.b16 %v711
  %v1145 = vunpack.c.l.b16 %v712
  %v1146 = vunpack.c.l.b16 %v713
  %v1147 = vunpack.c.l.b16 %v714
  %v1148 = vunpack.c.l.b16 %v715
  %v1149 = vpack.c.b16 %v1133, %v1133
  %v1150 = vpack.c.b16 %v1134, %v1134
  %v1151 = vpack.c.b16 %v1135, %v1135
  %v1152 = vpack.c.b16 %v1136, %v1136
  %v1153 = vpack.c.b16 %v1137, %v1137
  %v1154 = vpack.c.b16 %v1138, %v1138
  %v1155 = vpack.c.b16 %v1139, %v1139
  %v1156 = vpack.c.b16 %v1140, %v1140
  %v1157 = vpack.c.b16 %v1141, %v1141
  %v1158 = vpack.c.b16 %v1142, %v1142
  %v1159 = vpack.c.b16 %v1143, %v1143
  %v1160 = vpack.c.b16 %v1144, %v1144
  %v1161 = vpack.c.b16 %v1145, %v1145
  %v1162 = vpack.c.b16 %v1146, %v1146
  %v1163 = vpack.c.b16 %v1147, %v1147
  %v1164 = vpack.c.b16 %v1148, %v1148
  %1165 = vrot.lane.b32.xlu0 %v1149, 12
  %v1166 = vpop.permute.xlu0 %1165
  %1167 = vrot.lane.b32.xlu0 %v1150, 12
  %v1168 = vpop.permute.xlu0 %1167
  %1169 = vrot.lane.b32.xlu0 %v1151, 12
  %v1170 = vpop.permute.xlu0 %1169
  %1171 = vrot.lane.b32.xlu0 %v1152, 12
  %v1172 = vpop.permute.xlu0 %1171
  %1173 = vrot.lane.b32.xlu0 %v1153, 12
  %v1174 = vpop.permute.xlu0 %1173
  %1175 = vrot.lane.b32.xlu0 %v1154, 12
  %v1176 = vpop.permute.xlu0 %1175
  %1177 = vrot.lane.b32.xlu0 %v1155, 12
  %v1178 = vpop.permute.xlu0 %1177
  %1179 = vrot.lane.b32.xlu0 %v1156, 12
  %v1180 = vpop.permute.xlu0 %1179
  %1181 = vrot.lane.b32.xlu0 %v1157, 12
  %v1182 = vpop.permute.xlu0 %1181
  %1183 = vrot.lane.b32.xlu0 %v1158, 12
  %v1184 = vpop.permute.xlu0 %1183
  %1185 = vrot.lane.b32.xlu0 %v1159, 12
  %v1186 = vpop.permute.xlu0 %1185
  %1187 = vrot.lane.b32.xlu0 %v1160, 12
  %v1188 = vpop.permute.xlu0 %1187
  %1189 = vrot.lane.b32.xlu0 %v1161, 12
  %v1190 = vpop.permute.xlu0 %1189
  %1191 = vrot.lane.b32.xlu0 %v1162, 12
  %v1192 = vpop.permute.xlu0 %1191
  %1193 = vrot.lane.b32.xlu0 %v1163, 12
  %v1194 = vpop.permute.xlu0 %1193
  %1195 = vrot.lane.b32.xlu0 %v1164, 12
  %v1196 = vpop.permute.xlu0 %1195
  %v1213 = vunpack.c.l.b16 %v716
  %v1214 = vunpack.c.l.b16 %v717
  %v1215 = vunpack.c.l.b16 %v718
  %v1216 = vunpack.c.l.b16 %v719
  %v1217 = vunpack.c.l.b16 %v720
  %v1218 = vunpack.c.l.b16 %v721
  %v1219 = vunpack.c.l.b16 %v722
  %v1220 = vunpack.c.l.b16 %v723
  %v1221 = vunpack.c.l.b16 %v724
  %v1222 = vunpack.c.l.b16 %v725
  %v1223 = vunpack.c.l.b16 %v726
  %v1224 = vunpack.c.l.b16 %v727
  %v1225 = vunpack.c.l.b16 %v728
  %v1226 = vunpack.c.l.b16 %v729
  %v1227 = vunpack.c.l.b16 %v730
  %v1228 = vunpack.c.l.b16 %v731
  %v1229 = vpack.c.b16 %v1213, %v1133
  %v1230 = vpack.c.b16 %v1214, %v1134
  %v1231 = vpack.c.b16 %v1215, %v1135
  %v1232 = vpack.c.b16 %v1216, %v1136
  %v1233 = vpack.c.b16 %v1217, %v1137
  %v1234 = vpack.c.b16 %v1218, %v1138
  %v1235 = vpack.c.b16 %v1219, %v1139
  %v1236 = vpack.c.b16 %v1220, %v1140
  %v1237 = vpack.c.b16 %v1221, %v1141
  %v1238 = vpack.c.b16 %v1222, %v1142
  %v1239 = vpack.c.b16 %v1223, %v1143
  %v1240 = vpack.c.b16 %v1224, %v1144
  %v1241 = vpack.c.b16 %v1225, %v1145
  %v1242 = vpack.c.b16 %v1226, %v1146
  %v1243 = vpack.c.b16 %v1227, %v1147
  %v1244 = vpack.c.b16 %v1228, %v1148
  %v1246 = vshrl.u32 %v1229, 16
  %v1248 = vshll.u32 %v1229, 16
  %v1250 = vrot.slane %v1248, 1
  %v1251 = vor.u32 %v1246, %v1250
  %v1253 = vshrl.u32 %v1230, 16
  %v1255 = vshll.u32 %v1230, 16
  %v1257 = vrot.slane %v1255, 1
  %v1258 = vor.u32 %v1253, %v1257
  %v1260 = vshrl.u32 %v1231, 16
  %v1262 = vshll.u32 %v1231, 16
  %v1264 = vrot.slane %v1262, 1
  %v1265 = vor.u32 %v1260, %v1264
  %v1267 = vshrl.u32 %v1232, 16
  %v1269 = vshll.u32 %v1232, 16
  %v1271 = vrot.slane %v1269, 1
  %v1272 = vor.u32 %v1267, %v1271
  %v1274 = vshrl.u32 %v1233, 16
  %v1276 = vshll.u32 %v1233, 16
  %v1278 = vrot.slane %v1276, 1
  %v1279 = vor.u32 %v1274, %v1278
  %v1281 = vshrl.u32 %v1234, 16
  %v1283 = vshll.u32 %v1234, 16
  %v1285 = vrot.slane %v1283, 1
  %v1286 = vor.u32 %v1281, %v1285
  %v1288 = vshrl.u32 %v1235, 16
  %v1290 = vshll.u32 %v1235, 16
  %v1292 = vrot.slane %v1290, 1
  %v1293 = vor.u32 %v1288, %v1292
  %v1295 = vshrl.u32 %v1236, 16
  %v1297 = vshll.u32 %v1236, 16
  %v1299 = vrot.slane %v1297, 1
  %v1300 = vor.u32 %v1295, %v1299
  %v1302 = vshrl.u32 %v1237, 16
  %v1304 = vshll.u32 %v1237, 16
  %v1306 = vrot.slane %v1304, 1
  %v1307 = vor.u32 %v1302, %v1306
  %v1309 = vshrl.u32 %v1238, 16
  %v1311 = vshll.u32 %v1238, 16
  %v1313 = vrot.slane %v1311, 1
  %v1314 = vor.u32 %v1309, %v1313
  %v1316 = vshrl.u32 %v1239, 16
  %v1318 = vshll.u32 %v1239, 16
  %v1320 = vrot.slane %v1318, 1
  %v1321 = vor.u32 %v1316, %v1320
  %v1323 = vshrl.u32 %v1240, 16
  %v1325 = vshll.u32 %v1240, 16
  %v1327 = vrot.slane %v1325, 1
  %v1328 = vor.u32 %v1323, %v1327
  %v1330 = vshrl.u32 %v1241, 16
  %v1332 = vshll.u32 %v1241, 16
  %v1334 = vrot.slane %v1332, 1
  %v1335 = vor.u32 %v1330, %v1334
  %v1337 = vshrl.u32 %v1242, 16
  %v1339 = vshll.u32 %v1242, 16
  %v1341 = vrot.slane %v1339, 1
  %v1342 = vor.u32 %v1337, %v1341
  %v1344 = vshrl.u32 %v1243, 16
  %v1346 = vshll.u32 %v1243, 16
  %v1348 = vrot.slane %v1346, 1
  %v1349 = vor.u32 %v1344, %v1348
  %v1351 = vshrl.u32 %v1244, 16
  %v1353 = vshll.u32 %v1244, 16
  %v1355 = vrot.slane %v1353, 1
  %v1356 = vor.u32 %v1351, %v1355
  %1357 = vrot.lane.b32.xlu0 %v1251, 16
  %v1358 = vpop.permute.xlu0 %1357
  %1359 = vrot.lane.b32.xlu0 %v1258, 16
  %v1360 = vpop.permute.xlu0 %1359
  %1361 = vrot.lane.b32.xlu0 %v1265, 16
  %v1362 = vpop.permute.xlu0 %1361
  %1363 = vrot.lane.b32.xlu0 %v1272, 16
  %v1364 = vpop.permute.xlu0 %1363
  %1365 = vrot.lane.b32.xlu0 %v1279, 16
  %v1366 = vpop.permute.xlu0 %1365
  %1367 = vrot.lane.b32.xlu0 %v1286, 16
  %v1368 = vpop.permute.xlu0 %1367
  %1369 = vrot.lane.b32.xlu0 %v1293, 16
  %v1370 = vpop.permute.xlu0 %1369
  %1371 = vrot.lane.b32.xlu0 %v1300, 16
  %v1372 = vpop.permute.xlu0 %1371
  %1373 = vrot.lane.b32.xlu0 %v1307, 16
  %v1374 = vpop.permute.xlu0 %1373
  %1375 = vrot.lane.b32.xlu0 %v1314, 16
  %v1376 = vpop.permute.xlu0 %1375
  %1377 = vrot.lane.b32.xlu0 %v1321, 16
  %v1378 = vpop.permute.xlu0 %1377
  %1379 = vrot.lane.b32.xlu0 %v1328, 16
  %v1380 = vpop.permute.xlu0 %1379
  %1381 = vrot.lane.b32.xlu0 %v1335, 16
  %v1382 = vpop.permute.xlu0 %1381
  %1383 = vrot.lane.b32.xlu0 %v1342, 16
  %v1384 = vpop.permute.xlu0 %1383
  %1385 = vrot.lane.b32.xlu0 %v1349, 16
  %v1386 = vpop.permute.xlu0 %1385
  %1387 = vrot.lane.b32.xlu0 %v1356, 16
  %v1388 = vpop.permute.xlu0 %1387
  %v1405 = vunpack.c.l.b16 %v732
  %v1406 = vunpack.c.l.b16 %v733
  %v1407 = vunpack.c.l.b16 %v734
  %v1408 = vunpack.c.l.b16 %v735
  %v1409 = vunpack.c.l.b16 %v736
  %v1410 = vunpack.c.l.b16 %v737
  %v1411 = vunpack.c.l.b16 %v738
  %v1412 = vunpack.c.l.b16 %v739
  %v1413 = vunpack.c.l.b16 %v740
  %v1414 = vunpack.c.l.b16 %v741
  %v1415 = vunpack.c.l.b16 %v742
  %v1416 = vunpack.c.l.b16 %v743
  %v1417 = vunpack.c.l.b16 %v744
  %v1418 = vunpack.c.l.b16 %v745
  %v1419 = vunpack.c.l.b16 %v746
  %v1420 = vunpack.c.l.b16 %v747
  %v1421 = vpack.c.b16 %v1213, %v1405
  %v1422 = vpack.c.b16 %v1214, %v1406
  %v1423 = vpack.c.b16 %v1215, %v1407
  %v1424 = vpack.c.b16 %v1216, %v1408
  %v1425 = vpack.c.b16 %v1217, %v1409
  %v1426 = vpack.c.b16 %v1218, %v1410
  %v1427 = vpack.c.b16 %v1219, %v1411
  %v1428 = vpack.c.b16 %v1220, %v1412
  %v1429 = vpack.c.b16 %v1221, %v1413
  %v1430 = vpack.c.b16 %v1222, %v1414
  %v1431 = vpack.c.b16 %v1223, %v1415
  %v1432 = vpack.c.b16 %v1224, %v1416
  %v1433 = vpack.c.b16 %v1225, %v1417
  %v1434 = vpack.c.b16 %v1226, %v1418
  %v1435 = vpack.c.b16 %v1227, %v1419
  %v1436 = vpack.c.b16 %v1228, %v1420
  %v1437 = vrot.slane %v1421, 1
  %v1438 = vrot.slane %v1422, 1
  %v1439 = vrot.slane %v1423, 1
  %v1440 = vrot.slane %v1424, 1
  %v1441 = vrot.slane %v1425, 1
  %v1442 = vrot.slane %v1426, 1
  %v1443 = vrot.slane %v1427, 1
  %v1444 = vrot.slane %v1428, 1
  %v1445 = vrot.slane %v1429, 1
  %v1446 = vrot.slane %v1430, 1
  %v1447 = vrot.slane %v1431, 1
  %v1448 = vrot.slane %v1432, 1
  %v1449 = vrot.slane %v1433, 1
  %v1450 = vrot.slane %v1434, 1
  %v1451 = vrot.slane %v1435, 1
  %v1452 = vrot.slane %v1436, 1
  %1453 = vrot.lane.b32.xlu0 %v1437, 20
  %v1454 = vpop.permute.xlu0 %1453
  %1455 = vrot.lane.b32.xlu0 %v1438, 20
  %v1456 = vpop.permute.xlu0 %1455
  %1457 = vrot.lane.b32.xlu0 %v1439, 20
  %v1458 = vpop.permute.xlu0 %1457
  %1459 = vrot.lane.b32.xlu0 %v1440, 20
  %v1460 = vpop.permute.xlu0 %1459
  %1461 = vrot.lane.b32.xlu0 %v1441, 20
  %v1462 = vpop.permute.xlu0 %1461
  %1463 = vrot.lane.b32.xlu0 %v1442, 20
  %v1464 = vpop.permute.xlu0 %1463
  %1465 = vrot.lane.b32.xlu0 %v1443, 20
  %v1466 = vpop.permute.xlu0 %1465
  %1467 = vrot.lane.b32.xlu0 %v1444, 20
  %v1468 = vpop.permute.xlu0 %1467
  %1469 = vrot.lane.b32.xlu0 %v1445, 20
  %v1470 = vpop.permute.xlu0 %1469
  %1471 = vrot.lane.b32.xlu0 %v1446, 20
  %v1472 = vpop.permute.xlu0 %1471
  %1473 = vrot.lane.b32.xlu0 %v1447, 20
  %v1474 = vpop.permute.xlu0 %1473
  %1475 = vrot.lane.b32.xlu0 %v1448, 20
  %v1476 = vpop.permute.xlu0 %1475
  %1477 = vrot.lane.b32.xlu0 %v1449, 20
  %v1478 = vpop.permute.xlu0 %1477
  %1479 = vrot.lane.b32.xlu0 %v1450, 20
  %v1480 = vpop.permute.xlu0 %1479
  %1481 = vrot.lane.b32.xlu0 %v1451, 20
  %v1482 = vpop.permute.xlu0 %1481
  %1483 = vrot.lane.b32.xlu0 %v1452, 20
  %v1484 = vpop.permute.xlu0 %1483
  %v1501 = vunpack.c.l.b16 %v749
  %v1502 = vunpack.c.l.b16 %v750
  %v1503 = vunpack.c.l.b16 %v751
  %v1504 = vunpack.c.l.b16 %v752
  %v1505 = vunpack.c.l.b16 %v753
  %v1506 = vunpack.c.l.b16 %v754
  %v1507 = vunpack.c.l.b16 %v755
  %v1508 = vunpack.c.l.b16 %v756
  %v1509 = vunpack.c.l.b16 %v757
  %v1510 = vunpack.c.l.b16 %v758
  %v1511 = vunpack.c.l.b16 %v759
  %v1512 = vunpack.c.l.b16 %v760
  %v1513 = vunpack.c.l.b16 %v761
  %v1514 = vunpack.c.l.b16 %v762
  %v1515 = vunpack.c.l.b16 %v763
  %v1516 = vunpack.c.l.b16 %v764
  %v1517 = vpack.c.b16 %v1501, %v1501
  %v1518 = vpack.c.b16 %v1502, %v1502
  %v1519 = vpack.c.b16 %v1503, %v1503
  %v1520 = vpack.c.b16 %v1504, %v1504
  %v1521 = vpack.c.b16 %v1505, %v1505
  %v1522 = vpack.c.b16 %v1506, %v1506
  %v1523 = vpack.c.b16 %v1507, %v1507
  %v1524 = vpack.c.b16 %v1508, %v1508
  %v1525 = vpack.c.b16 %v1509, %v1509
  %v1526 = vpack.c.b16 %v1510, %v1510
  %v1527 = vpack.c.b16 %v1511, %v1511
  %v1528 = vpack.c.b16 %v1512, %v1512
  %v1529 = vpack.c.b16 %v1513, %v1513
  %v1530 = vpack.c.b16 %v1514, %v1514
  %v1531 = vpack.c.b16 %v1515, %v1515
  %v1532 = vpack.c.b16 %v1516, %v1516
  %1533 = vrot.lane.b32.xlu0 %v1517, 24
  %v1534 = vpop.permute.xlu0 %1533
  %1535 = vrot.lane.b32.xlu0 %v1518, 24
  %v1536 = vpop.permute.xlu0 %1535
  %1537 = vrot.lane.b32.xlu0 %v1519, 24
  %v1538 = vpop.permute.xlu0 %1537
  %1539 = vrot.lane.b32.xlu0 %v1520, 24
  %v1540 = vpop.permute.xlu0 %1539
  %1541 = vrot.lane.b32.xlu0 %v1521, 24
  %v1542 = vpop.permute.xlu0 %1541
  %1543 = vrot.lane.b32.xlu0 %v1522, 24
  %v1544 = vpop.permute.xlu0 %1543
  %1545 = vrot.lane.b32.xlu0 %v1523, 24
  %v1546 = vpop.permute.xlu0 %1545
  %1547 = vrot.lane.b32.xlu0 %v1524, 24
  %v1548 = vpop.permute.xlu0 %1547
  %1549 = vrot.lane.b32.xlu0 %v1525, 24
  %v1550 = vpop.permute.xlu0 %1549
  %1551 = vrot.lane.b32.xlu0 %v1526, 24
  %v1552 = vpop.permute.xlu0 %1551
  %1553 = vrot.lane.b32.xlu0 %v1527, 24
  %v1554 = vpop.permute.xlu0 %1553
  %1555 = vrot.lane.b32.xlu0 %v1528, 24
  %v1556 = vpop.permute.xlu0 %1555
  %1557 = vrot.lane.b32.xlu0 %v1529, 24
  %v1558 = vpop.permute.xlu0 %1557
  %1559 = vrot.lane.b32.xlu0 %v1530, 24
  %v1560 = vpop.permute.xlu0 %1559
  %1561 = vrot.lane.b32.xlu0 %v1531, 24
  %v1562 = vpop.permute.xlu0 %1561
  %1563 = vrot.lane.b32.xlu0 %v1532, 24
  %v1564 = vpop.permute.xlu0 %1563
  %v1581 = vunpack.c.l.b16 %v765
  %v1582 = vunpack.c.l.b16 %v766
  %v1583 = vunpack.c.l.b16 %v767
  %v1584 = vunpack.c.l.b16 %v768
  %v1585 = vunpack.c.l.b16 %v769
  %v1586 = vunpack.c.l.b16 %v770
  %v1587 = vunpack.c.l.b16 %v771
  %v1588 = vunpack.c.l.b16 %v772
  %v1589 = vunpack.c.l.b16 %v773
  %v1590 = vunpack.c.l.b16 %v774
  %v1591 = vunpack.c.l.b16 %v775
  %v1592 = vunpack.c.l.b16 %v776
  %v1593 = vunpack.c.l.b16 %v777
  %v1594 = vunpack.c.l.b16 %v778
  %v1595 = vunpack.c.l.b16 %v779
  %v1596 = vunpack.c.l.b16 %v780
  %v1597 = vpack.c.b16 %v1581, %v1501
  %v1598 = vpack.c.b16 %v1582, %v1502
  %v1599 = vpack.c.b16 %v1583, %v1503
  %v1600 = vpack.c.b16 %v1584, %v1504
  %v1601 = vpack.c.b16 %v1585, %v1505
  %v1602 = vpack.c.b16 %v1586, %v1506
  %v1603 = vpack.c.b16 %v1587, %v1507
  %v1604 = vpack.c.b16 %v1588, %v1508
  %v1605 = vpack.c.b16 %v1589, %v1509
  %v1606 = vpack.c.b16 %v1590, %v1510
  %v1607 = vpack.c.b16 %v1591, %v1511
  %v1608 = vpack.c.b16 %v1592, %v1512
  %v1609 = vpack.c.b16 %v1593, %v1513
  %v1610 = vpack.c.b16 %v1594, %v1514
  %v1611 = vpack.c.b16 %v1595, %v1515
  %v1612 = vpack.c.b16 %v1596, %v1516
  %v1614 = vshrl.u32 %v1597, 16
  %v1616 = vshll.u32 %v1597, 16
  %v1618 = vrot.slane %v1616, 1
  %v1619 = vor.u32 %v1614, %v1618
  %v1621 = vshrl.u32 %v1598, 16
  %v1623 = vshll.u32 %v1598, 16
  %v1625 = vrot.slane %v1623, 1
  %v1626 = vor.u32 %v1621, %v1625
  %v1628 = vshrl.u32 %v1599, 16
  %v1630 = vshll.u32 %v1599, 16
  %v1632 = vrot.slane %v1630, 1
  %v1633 = vor.u32 %v1628, %v1632
  %v1635 = vshrl.u32 %v1600, 16
  %v1637 = vshll.u32 %v1600, 16
  %v1639 = vrot.slane %v1637, 1
  %v1640 = vor.u32 %v1635, %v1639
  %v1642 = vshrl.u32 %v1601, 16
  %v1644 = vshll.u32 %v1601, 16
  %v1646 = vrot.slane %v1644, 1
  %v1647 = vor.u32 %v1642, %v1646
  %v1649 = vshrl.u32 %v1602, 16
  %v1651 = vshll.u32 %v1602, 16
  %v1653 = vrot.slane %v1651, 1
  %v1654 = vor.u32 %v1649, %v1653
  %v1656 = vshrl.u32 %v1603, 16
  %v1658 = vshll.u32 %v1603, 16
  %v1660 = vrot.slane %v1658, 1
  %v1661 = vor.u32 %v1656, %v1660
  %v1663 = vshrl.u32 %v1604, 16
  %v1665 = vshll.u32 %v1604, 16
  %v1667 = vrot.slane %v1665, 1
  %v1668 = vor.u32 %v1663, %v1667
  %v1670 = vshrl.u32 %v1605, 16
  %v1672 = vshll.u32 %v1605, 16
  %v1674 = vrot.slane %v1672, 1
  %v1675 = vor.u32 %v1670, %v1674
  %v1677 = vshrl.u32 %v1606, 16
  %v1679 = vshll.u32 %v1606, 16
  %v1681 = vrot.slane %v1679, 1
  %v1682 = vor.u32 %v1677, %v1681
  %v1684 = vshrl.u32 %v1607, 16
  %v1686 = vshll.u32 %v1607, 16
  %v1688 = vrot.slane %v1686, 1
  %v1689 = vor.u32 %v1684, %v1688
  %v1691 = vshrl.u32 %v1608, 16
  %v1693 = vshll.u32 %v1608, 16
  %v1695 = vrot.slane %v1693, 1
  %v1696 = vor.u32 %v1691, %v1695
  %v1698 = vshrl.u32 %v1609, 16
  %v1700 = vshll.u32 %v1609, 16
  %v1702 = vrot.slane %v1700, 1
  %v1703 = vor.u32 %v1698, %v1702
  %v1705 = vshrl.u32 %v1610, 16
  %v1707 = vshll.u32 %v1610, 16
  %v1709 = vrot.slane %v1707, 1
  %v1710 = vor.u32 %v1705, %v1709
  %v1712 = vshrl.u32 %v1611, 16
  %v1714 = vshll.u32 %v1611, 16
  %v1716 = vrot.slane %v1714, 1
  %v1717 = vor.u32 %v1712, %v1716
  %v1719 = vshrl.u32 %v1612, 16
  %v1721 = vshll.u32 %v1612, 16
  %v1723 = vrot.slane %v1721, 1
  %v1724 = vor.u32 %v1719, %v1723
  %1725 = vrot.lane.b32.xlu0 %v1619, 28
  %v1726 = vpop.permute.xlu0 %1725
  %1727 = vrot.lane.b32.xlu0 %v1626, 28
  %v1728 = vpop.permute.xlu0 %1727
  %1729 = vrot.lane.b32.xlu0 %v1633, 28
  %v1730 = vpop.permute.xlu0 %1729
  %1731 = vrot.lane.b32.xlu0 %v1640, 28
  %v1732 = vpop.permute.xlu0 %1731
  %1733 = vrot.lane.b32.xlu0 %v1647, 28
  %v1734 = vpop.permute.xlu0 %1733
  %1735 = vrot.lane.b32.xlu0 %v1654, 28
  %v1736 = vpop.permute.xlu0 %1735
  %1737 = vrot.lane.b32.xlu0 %v1661, 28
  %v1738 = vpop.permute.xlu0 %1737
  %1739 = vrot.lane.b32.xlu0 %v1668, 28
  %v1740 = vpop.permute.xlu0 %1739
  %1741 = vrot.lane.b32.xlu0 %v1675, 28
  %v1742 = vpop.permute.xlu0 %1741
  %1743 = vrot.lane.b32.xlu0 %v1682, 28
  %v1744 = vpop.permute.xlu0 %1743
  %1745 = vrot.lane.b32.xlu0 %v1689, 28
  %v1746 = vpop.permute.xlu0 %1745
  %1747 = vrot.lane.b32.xlu0 %v1696, 28
  %v1748 = vpop.permute.xlu0 %1747
  %1749 = vrot.lane.b32.xlu0 %v1703, 28
  %v1750 = vpop.permute.xlu0 %1749
  %1751 = vrot.lane.b32.xlu0 %v1710, 28
  %v1752 = vpop.permute.xlu0 %1751
  %1753 = vrot.lane.b32.xlu0 %v1717, 28
  %v1754 = vpop.permute.xlu0 %1753
  %1755 = vrot.lane.b32.xlu0 %v1724, 28
  %v1756 = vpop.permute.xlu0 %1755
  %v1773 = vunpack.c.l.b16 %v781
  %v1774 = vunpack.c.l.b16 %v782
  %v1775 = vunpack.c.l.b16 %v783
  %v1776 = vunpack.c.l.b16 %v784
  %v1777 = vunpack.c.l.b16 %v785
  %v1778 = vunpack.c.l.b16 %v786
  %v1779 = vunpack.c.l.b16 %v787
  %v1780 = vunpack.c.l.b16 %v788
  %v1781 = vunpack.c.l.b16 %v789
  %v1782 = vunpack.c.l.b16 %v790
  %v1783 = vunpack.c.l.b16 %v791
  %v1784 = vunpack.c.l.b16 %v792
  %v1785 = vunpack.c.l.b16 %v793
  %v1786 = vunpack.c.l.b16 %v794
  %v1787 = vunpack.c.l.b16 %v795
  %v1788 = vunpack.c.l.b16 %v796
  %v1789 = vpack.c.b16 %v1581, %v1773
  %v1790 = vpack.c.b16 %v1582, %v1774
  %v1791 = vpack.c.b16 %v1583, %v1775
  %v1792 = vpack.c.b16 %v1584, %v1776
  %v1793 = vpack.c.b16 %v1585, %v1777
  %v1794 = vpack.c.b16 %v1586, %v1778
  %v1795 = vpack.c.b16 %v1587, %v1779
  %v1796 = vpack.c.b16 %v1588, %v1780
  %v1797 = vpack.c.b16 %v1589, %v1781
  %v1798 = vpack.c.b16 %v1590, %v1782
  %v1799 = vpack.c.b16 %v1591, %v1783
  %v1800 = vpack.c.b16 %v1592, %v1784
  %v1801 = vpack.c.b16 %v1593, %v1785
  %v1802 = vpack.c.b16 %v1594, %v1786
  %v1803 = vpack.c.b16 %v1595, %v1787
  %v1804 = vpack.c.b16 %v1596, %v1788
  %v1805 = vrot.slane %v1789, 1
  %v1806 = vrot.slane %v1790, 1
  %v1807 = vrot.slane %v1791, 1
  %v1808 = vrot.slane %v1792, 1
  %v1809 = vrot.slane %v1793, 1
  %v1810 = vrot.slane %v1794, 1
  %v1811 = vrot.slane %v1795, 1
  %v1812 = vrot.slane %v1796, 1
  %v1813 = vrot.slane %v1797, 1
  %v1814 = vrot.slane %v1798, 1
  %v1815 = vrot.slane %v1799, 1
  %v1816 = vrot.slane %v1800, 1
  %v1817 = vrot.slane %v1801, 1
  %v1818 = vrot.slane %v1802, 1
  %v1819 = vrot.slane %v1803, 1
  %v1820 = vrot.slane %v1804, 1
  %1821 = vrot.lane.b32.xlu0 %v1805, 32
  %v1822 = vpop.permute.xlu0 %1821
  %1823 = vrot.lane.b32.xlu0 %v1806, 32
  %v1824 = vpop.permute.xlu0 %1823
  %1825 = vrot.lane.b32.xlu0 %v1807, 32
  %v1826 = vpop.permute.xlu0 %1825
  %1827 = vrot.lane.b32.xlu0 %v1808, 32
  %v1828 = vpop.permute.xlu0 %1827
  %1829 = vrot.lane.b32.xlu0 %v1809, 32
  %v1830 = vpop.permute.xlu0 %1829
  %1831 = vrot.lane.b32.xlu0 %v1810, 32
  %v1832 = vpop.permute.xlu0 %1831
  %1833 = vrot.lane.b32.xlu0 %v1811, 32
  %v1834 = vpop.permute.xlu0 %1833
  %1835 = vrot.lane.b32.xlu0 %v1812, 32
  %v1836 = vpop.permute.xlu0 %1835
  %1837 = vrot.lane.b32.xlu0 %v1813, 32
  %v1838 = vpop.permute.xlu0 %1837
  %1839 = vrot.lane.b32.xlu0 %v1814, 32
  %v1840 = vpop.permute.xlu0 %1839
  %1841 = vrot.lane.b32.xlu0 %v1815, 32
  %v1842 = vpop.permute.xlu0 %1841
  %1843 = vrot.lane.b32.xlu0 %v1816, 32
  %v1844 = vpop.permute.xlu0 %1843
  %1845 = vrot.lane.b32.xlu0 %v1817, 32
  %v1846 = vpop.permute.xlu0 %1845
  %1847 = vrot.lane.b32.xlu0 %v1818, 32
  %v1848 = vpop.permute.xlu0 %1847
  %1849 = vrot.lane.b32.xlu0 %v1819, 32
  %v1850 = vpop.permute.xlu0 %1849
  %1851 = vrot.lane.b32.xlu0 %v1820, 32
  %v1852 = vpop.permute.xlu0 %1851
  %vm1853 = vcmask 31744
  %v1856 = vsel %vm1853, %v652, %v990
  %v1859 = vsel %vm1853, %v653, %v992
  %v1862 = vsel %vm1853, %v654, %v994
  %v1865 = vsel %vm1853, %v655, %v996
  %v1868 = vsel %vm1853, %v656, %v998
  %v1871 = vsel %vm1853, %v657, %v1000
  %v1874 = vsel %vm1853, %v658, %v1002
  %v1877 = vsel %vm1853, %v659, %v1004
  %v1880 = vsel %vm1853, %v660, %v1006
  %v1883 = vsel %vm1853, %v661, %v1008
  %v1886 = vsel %vm1853, %v662, %v1010
  %v1889 = vsel %vm1853, %v663, %v1012
  %v1892 = vsel %vm1853, %v664, %v1014
  %v1895 = vsel %vm1853, %v665, %v1016
  %v1898 = vsel %vm1853, %v666, %v1018
  %v1901 = vsel %vm1853, %v667, %v1020
  %vm1902 = vcmask 64512
  %v1904 = vsel %vm1902, %v1856, %v1086
  %v1906 = vsel %vm1902, %v1859, %v1088
  %v1908 = vsel %vm1902, %v1862, %v1090
  %v1910 = vsel %vm1902, %v1865, %v1092
  %v1912 = vsel %vm1902, %v1868, %v1094
  %v1914 = vsel %vm1902, %v1871, %v1096
  %v1916 = vsel %vm1902, %v1874, %v1098
  %v1918 = vsel %vm1902, %v1877, %v1100
  %v1920 = vsel %vm1902, %v1880, %v1102
  %v1922 = vsel %vm1902, %v1883, %v1104
  %v1924 = vsel %vm1902, %v1886, %v1106
  %v1926 = vsel %vm1902, %v1889, %v1108
  %v1928 = vsel %vm1902, %v1892, %v1110
  %v1930 = vsel %vm1902, %v1895, %v1112
  %v1932 = vsel %vm1902, %v1898, %v1114
  %v1934 = vsel %vm1902, %v1901, %v1116
  %vm1935 = vcmask 97280
  %v1937 = vsel %vm1935, %v1904, %v1166
  %v1939 = vsel %vm1935, %v1906, %v1168
  %v1941 = vsel %vm1935, %v1908, %v1170
  %v1943 = vsel %vm1935, %v1910, %v1172
  %v1945 = vsel %vm1935, %v1912, %v1174
  %v1947 = vsel %vm1935, %v1914, %v1176
  %v1949 = vsel %vm1935, %v1916, %v1178
  %v1951 = vsel %vm1935, %v1918, %v1180
  %v1953 = vsel %vm1935, %v1920, %v1182
  %v1955 = vsel %vm1935, %v1922, %v1184
  %v1957 = vsel %vm1935, %v1924, %v1186
  %v1959 = vsel %vm1935, %v1926, %v1188
  %v1961 = vsel %vm1935, %v1928, %v1190
  %v1963 = vsel %vm1935, %v1930, %v1192
  %v1965 = vsel %vm1935, %v1932, %v1194
  %v1967 = vsel %vm1935, %v1934, %v1196
  %vm1968 = vcmask 130048
  %v1970 = vsel %vm1968, %v1937, %v1358
  %v1972 = vsel %vm1968, %v1939, %v1360
  %v1974 = vsel %vm1968, %v1941, %v1362
  %v1976 = vsel %vm1968, %v1943, %v1364
  %v1978 = vsel %vm1968, %v1945, %v1366
  %v1980 = vsel %vm1968, %v1947, %v1368
  %v1982 = vsel %vm1968, %v1949, %v1370
  %v1984 = vsel %vm1968, %v1951, %v1372
  %v1986 = vsel %vm1968, %v1953, %v1374
  %v1988 = vsel %vm1968, %v1955, %v1376
  %v1990 = vsel %vm1968, %v1957, %v1378
  %v1992 = vsel %vm1968, %v1959, %v1380
  %v1994 = vsel %vm1968, %v1961, %v1382
  %v1996 = vsel %vm1968, %v1963, %v1384
  %v1998 = vsel %vm1968, %v1965, %v1386
  %v2000 = vsel %vm1968, %v1967, %v1388
  %vm2001 = vcmask 162816
  %v2003 = vsel %vm2001, %v1970, %v1454
  %v2005 = vsel %vm2001, %v1972, %v1456
  %v2007 = vsel %vm2001, %v1974, %v1458
  %v2009 = vsel %vm2001, %v1976, %v1460
  %v2011 = vsel %vm2001, %v1978, %v1462
  %v2013 = vsel %vm2001, %v1980, %v1464
  %v2015 = vsel %vm2001, %v1982, %v1466
  %v2017 = vsel %vm2001, %v1984, %v1468
  %v2019 = vsel %vm2001, %v1986, %v1470
  %v2021 = vsel %vm2001, %v1988, %v1472
  %v2023 = vsel %vm2001, %v1990, %v1474
  %v2025 = vsel %vm2001, %v1992, %v1476
  %v2027 = vsel %vm2001, %v1994, %v1478
  %v2029 = vsel %vm2001, %v1996, %v1480
  %v2031 = vsel %vm2001, %v1998, %v1482
  %v2033 = vsel %vm2001, %v2000, %v1484
  %vm2034 = vcmask 195584
  %v2036 = vsel %vm2034, %v2003, %v1534
  %v2038 = vsel %vm2034, %v2005, %v1536
  %v2040 = vsel %vm2034, %v2007, %v1538
  %v2042 = vsel %vm2034, %v2009, %v1540
  %v2044 = vsel %vm2034, %v2011, %v1542
  %v2046 = vsel %vm2034, %v2013, %v1544
  %v2048 = vsel %vm2034, %v2015, %v1546
  %v2050 = vsel %vm2034, %v2017, %v1548
  %v2052 = vsel %vm2034, %v2019, %v1550
  %v2054 = vsel %vm2034, %v2021, %v1552
  %v2056 = vsel %vm2034, %v2023, %v1554
  %v2058 = vsel %vm2034, %v2025, %v1556
  %v2060 = vsel %vm2034, %v2027, %v1558
  %v2062 = vsel %vm2034, %v2029, %v1560
  %v2064 = vsel %vm2034, %v2031, %v1562
  %v2066 = vsel %vm2034, %v2033, %v1564
  %vm2067 = vcmask 228352
  %v2069 = vsel %vm2067, %v2036, %v1726
  %v2071 = vsel %vm2067, %v2038, %v1728
  %v2073 = vsel %vm2067, %v2040, %v1730
  %v2075 = vsel %vm2067, %v2042, %v1732
  %v2077 = vsel %vm2067, %v2044, %v1734
  %v2079 = vsel %vm2067, %v2046, %v1736
  %v2081 = vsel %vm2067, %v2048, %v1738
  %v2083 = vsel %vm2067, %v2050, %v1740
  %v2085 = vsel %vm2067, %v2052, %v1742
  %v2087 = vsel %vm2067, %v2054, %v1744
  %v2089 = vsel %vm2067, %v2056, %v1746
  %v2091 = vsel %vm2067, %v2058, %v1748
  %v2093 = vsel %vm2067, %v2060, %v1750
  %v2095 = vsel %vm2067, %v2062, %v1752
  %v2097 = vsel %vm2067, %v2064, %v1754
  %v2099 = vsel %vm2067, %v2066, %v1756
  %vm2100 = vcmask 261120
  %v2102 = vsel %vm2100, %v2069, %v1822
  %v2104 = vsel %vm2100, %v2071, %v1824
  %v2106 = vsel %vm2100, %v2073, %v1826
  %v2108 = vsel %vm2100, %v2075, %v1828
  %v2110 = vsel %vm2100, %v2077, %v1830
  %v2112 = vsel %vm2100, %v2079, %v1832
  %v2114 = vsel %vm2100, %v2081, %v1834
  %v2116 = vsel %vm2100, %v2083, %v1836
  %v2118 = vsel %vm2100, %v2085, %v1838
  %v2120 = vsel %vm2100, %v2087, %v1840
  %v2122 = vsel %vm2100, %v2089, %v1842
  %v2124 = vsel %vm2100, %v2091, %v1844
  %v2126 = vsel %vm2100, %v2093, %v1846
  %v2128 = vsel %vm2100, %v2095, %v1848
  %v2130 = vsel %vm2100, %v2097, %v1850
  %v2132 = vsel %vm2100, %v2099, %v1852
  %v2133 = vld [vmem:[%s1] sm:$0xf]
  %v2134 = vld [vmem:[%s1 + $0x4] sm:$0xf]
  %v2135 = vld [vmem:[%s1 + $0x8] sm:$0xf]
  %v2136 = vld [vmem:[%s1 + $0xc] sm:$0xf]
  %v2137 = vld [vmem:[%s1 + $0x10] sm:$0x3]
  %v2154 = vunpack.c.l.b16 %v2102
  %v2155 = vunpack.c.l.b16 %v2104
  %v2156 = vunpack.c.l.b16 %v2106
  %v2157 = vunpack.c.l.b16 %v2108
  %v2158 = vunpack.c.l.b16 %v2110
  %v2159 = vunpack.c.l.b16 %v2112
  %v2160 = vunpack.c.l.b16 %v2114
  %v2161 = vunpack.c.l.b16 %v2116
  %v2162 = vunpack.c.l.b16 %v2118
  %v2163 = vunpack.c.l.b16 %v2120
  %v2164 = vunpack.c.l.b16 %v2122
  %v2165 = vunpack.c.l.b16 %v2124
  %v2166 = vunpack.c.l.b16 %v2126
  %v2167 = vunpack.c.l.b16 %v2128
  %v2168 = vunpack.c.l.b16 %v2130
  %v2169 = vunpack.c.l.b16 %v2132
  %v2170 = vpack.c.b16 %v2155, %v2154
  %v2171 = vpack.c.b16 %v2157, %v2156
  %v2172 = vpack.c.b16 %v2159, %v2158
  %v2173 = vpack.c.b16 %v2161, %v2160
  %v2174 = vpack.c.b16 %v2163, %v2162
  %v2175 = vpack.c.b16 %v2165, %v2164
  %v2176 = vpack.c.b16 %v2167, %v2166
  %v2177 = vpack.c.b16 %v2169, %v2168
  %v2183 = vunpack.c.l.b16 %v2133
  %v2184 = vunpack.c.l.b16 %v2134
  %v2185 = vunpack.c.l.b16 %v2135
  %v2186 = vunpack.c.l.b16 %v2136
  %v2187 = vunpack.c.l.b16 %v2137
  %v2188 = vpack.c.b16 %v2184, %v2183
  %v2189 = vpack.c.b16 %v2186, %v2185
  %v2190 = vpack.c.b16 %v2187, %v2187
  %vm2193 = vcmask 293888
  %v2195 = vsel %vm2193, %v2170, 0
  %v2198 = vsel %vm2193, %v2171, 0
  %v2201 = vsel %vm2193, %v2172, 0
  %v2204 = vsel %vm2193, %v2173, 0
  %v2207 = vsel %vm2193, %v2174, 0
  %v2210 = vsel %vm2193, %v2175, 0
  %v2213 = vsel %vm2193, %v2176, 0
  %v2216 = vsel %vm2193, %v2177, 0
  %vm2218 = vcmask 1041408
  %v2220 = vsel %vm2218, %v2190, 0
  %2222 = vmatprep.subr.bf16.mxu0 0
  %2223 = vmatpush1.bf16.msra.mxu0 %v2188
  %2224 = vmatprep.subr.bf16.mxu0 0
  %2225 = vmatpush1.bf16.msra.mxu0 %v2189
  %2226 = vmatprep.subr.bf16.mxu0 0
  %2227 = vmatpush1.bf16.msra.mxu0 %v2220
  %2228 = vmatprep.subr.bf16.mxu0 0
  %2229 = vmatpush1.bf16.msra.mxu0 0
  %2230 = vmatprep.subr.bf16.mxu0 0
  %2231 = vmatpush1.bf16.msra.mxu0 0
  %2232 = vmatprep.subr.bf16.mxu0 0
  %2233 = vmatpush1.bf16.msra.mxu0 0
  %2234 = vmatprep.subr.bf16.mxu0 0
  %2235 = vmatpush1.bf16.msra.mxu0 0
  %2236 = vmatprep.subr.bf16.mxu0 0
  %2237 = vmatpush1.bf16.msra.mxu0 0
  %2238 = vmatprep.subr.bf16.mxu0 0
  %2239 = vmatpush1.bf16.msra.mxu0 0
  %2240 = vmatprep.subr.bf16.mxu0 0
  %2241 = vmatpush1.bf16.msra.mxu0 0
  %2242 = vmatprep.subr.bf16.mxu0 0
  %2243 = vmatpush1.bf16.msra.mxu0 0
  %2244 = vmatprep.subr.bf16.mxu0 0
  %2245 = vmatpush1.bf16.msra.mxu0 0
  %2246 = vmatprep.subr.bf16.mxu0 0
  %2247 = vmatpush1.bf16.msra.mxu0 0
  %2248 = vmatprep.subr.bf16.mxu0 0
  %2249 = vmatpush1.bf16.msra.mxu0 0
  %2250 = vmatprep.subr.bf16.mxu0 0
  %2251 = vmatpush1.bf16.msra.mxu0 0
  %2252 = vmatprep.subr.bf16.mxu0 0
  %2253 = vmatpush1.bf16.msra.mxu0 0
  %2254 = vmatprep.mubr.bf16.mxu0 0
  %2255 = vmatmul.mubr.bf16.gmra.mrb[0].mxu0 %v2195
  %v2256 = vpop.f32.mrb[0].mxu0
  %v2257 = vadd.f32 0.0, %v2256
  %v2258 = vpop.f32.mrb[0].mxu0
  %v2259 = vpop.f32.mrb[0].mxu0
  %v2260 = vadd.f32 0.0, %v2259
  %v2261 = vpop.f32.mrb[0].mxu0
  %2262 = vmatprep.mubr.bf16.mxu0 0
  %2263 = vmatmul.mubr.bf16.gmra.mrb[0].mxu0 %v2198
  %v2264 = vpop.f32.mrb[0].mxu0
  %v2265 = vadd.f32 0.0, %v2264
  %v2266 = vpop.f32.mrb[0].mxu0
  %v2267 = vpop.f32.mrb[0].mxu0
  %v2268 = vadd.f32 0.0, %v2267
  %v2269 = vpop.f32.mrb[0].mxu0
  %2270 = vmatprep.mubr.bf16.mxu0 0
  %2271 = vmatmul.mubr.bf16.gmra.mrb[0].mxu0 %v2201
  %v2272 = vpop.f32.mrb[0].mxu0
  %v2273 = vadd.f32 0.0, %v2272
  %v2274 = vpop.f32.mrb[0].mxu0
  %v2275 = vpop.f32.mrb[0].mxu0
  %v2276 = vadd.f32 0.0, %v2275
  %v2277 = vpop.f32.mrb[0].mxu0
  %2278 = vmatprep.mubr.bf16.mxu0 0
  %2279 = vmatmul.mubr.bf16.gmra.mrb[0].mxu0 %v2204
  %v2280 = vpop.f32.mrb[0].mxu0
  %v2281 = vadd.f32 0.0, %v2280
  %v2282 = vpop.f32.mrb[0].mxu0
  %v2283 = vpop.f32.mrb[0].mxu0
  %v2284 = vadd.f32 0.0, %v2283
  %v2285 = vpop.f32.mrb[0].mxu0
  %2286 = vmatprep.mubr.bf16.mxu0 0
  %2287 = vmatmul.mubr.bf16.gmra.mrb[0].mxu0 %v2207
  %v2288 = vpop.f32.mrb[0].mxu0
  %v2289 = vadd.f32 0.0, %v2288
  %v2290 = vpop.f32.mrb[0].mxu0
  %v2291 = vpop.f32.mrb[0].mxu0
  %v2292 = vadd.f32 0.0, %v2291
  %v2293 = vpop.f32.mrb[0].mxu0
  %2294 = vmatprep.mubr.bf16.mxu0 0
  %2295 = vmatmul.mubr.bf16.gmra.mrb[0].mxu0 %v2210
  %v2296 = vpop.f32.mrb[0].mxu0
  %v2297 = vadd.f32 0.0, %v2296
  %v2298 = vpop.f32.mrb[0].mxu0
  %v2299 = vpop.f32.mrb[0].mxu0
  %v2300 = vadd.f32 0.0, %v2299
  %v2301 = vpop.f32.mrb[0].mxu0
  %2302 = vmatprep.mubr.bf16.mxu0 0
  %2303 = vmatmul.mubr.bf16.gmra.mrb[0].mxu0 %v2213
  %v2304 = vpop.f32.mrb[0].mxu0
  %v2305 = vadd.f32 0.0, %v2304
  %v2306 = vpop.f32.mrb[0].mxu0
  %v2307 = vpop.f32.mrb[0].mxu0
  %v2308 = vadd.f32 0.0, %v2307
  %v2309 = vpop.f32.mrb[0].mxu0
  %2310 = vmatprep.mubr.bf16.mxu0 0
  %2311 = vmatmul.mubr.bf16.gmra.mrb[0].mxu0 %v2216
  %v2312 = vpop.f32.mrb[0].mxu0
  %v2313 = vadd.f32 0.0, %v2312
  %v2314 = vpop.f32.mrb[0].mxu0
  %v2315 = vpop.f32.mrb[0].mxu0
  %v2316 = vadd.f32 0.0, %v2315
  %v2317 = vpop.f32.mrb[0].mxu0
  %2318 = vdwg.mxu0
  %v2319 = vadd.f32 %v2257, %v2260
  %v2320 = vadd.f32 %v2319, %v2265
  %v2321 = vadd.f32 %v2320, %v2268
  %v2322 = vadd.f32 %v2321, %v2273
  %v2323 = vadd.f32 %v2322, %v2276
  %v2324 = vadd.f32 %v2323, %v2281
  %v2325 = vadd.f32 %v2324, %v2284
  %v2326 = vadd.f32 %v2325, %v2289
  %v2327 = vadd.f32 %v2326, %v2292
  %v2328 = vadd.f32 %v2327, %v2297
  %v2329 = vadd.f32 %v2328, %v2300
  %v2330 = vadd.f32 %v2329, %v2305
  %v2331 = vadd.f32 %v2330, %v2308
  %v2332 = vadd.f32 %v2331, %v2313
  %v2333 = vadd.f32 %v2332, %v2316
  %v2334 = vrot.slane %v2333, 4
  %v2335 = vadd.f32 %v2333, %v2334
  %v2336 = vrot.slane %v2335, 2
  %v2337 = vadd.f32 %v2335, %v2336
  %v2338 = vrot.slane %v2337, 1
  %v2339 = vadd.f32 %v2337, %v2338
  %v2340 = vmul.f32 %v2339, 0.0078125
  %v2341 = vmul.f32 %v2257, %v2257
  %v2342 = vmul.f32 %v2260, %v2260
  %v2343 = vmul.f32 %v2265, %v2265
  %v2344 = vmul.f32 %v2268, %v2268
  %v2345 = vmul.f32 %v2273, %v2273
  %v2346 = vmul.f32 %v2276, %v2276
  %v2347 = vmul.f32 %v2281, %v2281
  %v2348 = vmul.f32 %v2284, %v2284
  %v2349 = vmul.f32 %v2289, %v2289
  %v2350 = vmul.f32 %v2292, %v2292
  %v2351 = vmul.f32 %v2297, %v2297
  %v2352 = vmul.f32 %v2300, %v2300
  %v2353 = vmul.f32 %v2305, %v2305
  %v2354 = vmul.f32 %v2308, %v2308
  %v2355 = vmul.f32 %v2313, %v2313
  %v2356 = vmul.f32 %v2316, %v2316
  %v2357 = vadd.f32 %v2341, %v2342
  %v2358 = vadd.f32 %v2357, %v2343
  %v2359 = vadd.f32 %v2358, %v2344
  %v2360 = vadd.f32 %v2359, %v2345
  %v2361 = vadd.f32 %v2360, %v2346
  %v2362 = vadd.f32 %v2361, %v2347
  %v2363 = vadd.f32 %v2362, %v2348
  %v2364 = vadd.f32 %v2363, %v2349
  %v2365 = vadd.f32 %v2364, %v2350
  %v2366 = vadd.f32 %v2365, %v2351
  %v2367 = vadd.f32 %v2366, %v2352
  %v2368 = vadd.f32 %v2367, %v2353
  %v2369 = vadd.f32 %v2368, %v2354
  %v2370 = vadd.f32 %v2369, %v2355
  %v2371 = vadd.f32 %v2370, %v2356
  %v2372 = vrot.slane %v2371, 4
  %v2373 = vadd.f32 %v2371, %v2372
  %v2374 = vrot.slane %v2373, 2
  %v2375 = vadd.f32 %v2373, %v2374
  %v2376 = vrot.slane %v2375, 1
  %v2377 = vadd.f32 %v2375, %v2376
  %v2378 = vmul.f32 %v2377, 0.0078125
  %v2379 = vmul.f32 %v2340, %v2340
  %v2380 = vsub.f32 %v2378, %v2379
  %v2381 = vld [vmem:[%s2] sm:$0x1]
  %v2382 = vadd.f32 %v2380, 1e-05
  %v2383 = vrsqrt.pop %v2382
  %v2384 = vmul.f32 %v2381, %v2383
  %v2385 = vld [vmem:[%s3] sm:$0x1]
  %v2386 = vmul.f32 %v2340, %v2384
  %v2387 = vsub.f32 %v2385, %v2386
  %v2389 = vlaneseq
  %v2390 = vshrl.u32 %v2389, 7
  %v2391 = vsub.s32 0, %v2390
  %v2392 = vrot.slane %v2384, %v2391
  %v2394 = vmul.f32 %v2257, %v2392
  %v2395 = vmul.f32 %v2260, %v2392
  %v2396 = vmul.f32 %v2265, %v2392
  %v2397 = vmul.f32 %v2268, %v2392
  %v2398 = vmul.f32 %v2273, %v2392
  %v2399 = vmul.f32 %v2276, %v2392
  %v2400 = vmul.f32 %v2281, %v2392
  %v2401 = vmul.f32 %v2284, %v2392
  %v2402 = vmul.f32 %v2289, %v2392
  %v2403 = vmul.f32 %v2292, %v2392
  %v2404 = vmul.f32 %v2297, %v2392
  %v2405 = vmul.f32 %v2300, %v2392
  %v2406 = vmul.f32 %v2305, %v2392
  %v2407 = vmul.f32 %v2308, %v2392
  %v2408 = vmul.f32 %v2313, %v2392
  %v2409 = vmul.f32 %v2316, %v2392
  %v2411 = vlaneseq
  %v2412 = vshrl.u32 %v2411, 7
  %v2413 = vsub.s32 0, %v2412
  %v2414 = vrot.slane %v2387, %v2413
  %v2416 = vadd.f32 %v2394, %v2414
  %v2417 = vadd.f32 %v2395, %v2414
  %v2418 = vadd.f32 %v2396, %v2414
  %v2419 = vadd.f32 %v2397, %v2414
  %v2420 = vadd.f32 %v2398, %v2414
  %v2421 = vadd.f32 %v2399, %v2414
  %v2422 = vadd.f32 %v2400, %v2414
  %v2423 = vadd.f32 %v2401, %v2414
  %v2424 = vadd.f32 %v2402, %v2414
  %v2425 = vadd.f32 %v2403, %v2414
  %v2426 = vadd.f32 %v2404, %v2414
  %v2427 = vadd.f32 %v2405, %v2414
  %v2428 = vadd.f32 %v2406, %v2414
  %v2429 = vadd.f32 %v2407, %v2414
  %v2430 = vadd.f32 %v2408, %v2414
  %v2431 = vadd.f32 %v2409, %v2414
  %v2432 = vmax.f32 %v2416, 0.0
  %v2433 = vmax.f32 %v2417, 0.0
  %v2434 = vmax.f32 %v2418, 0.0
  %v2435 = vmax.f32 %v2419, 0.0
  %v2436 = vmax.f32 %v2420, 0.0
  %v2437 = vmax.f32 %v2421, 0.0
  %v2438 = vmax.f32 %v2422, 0.0
  %v2439 = vmax.f32 %v2423, 0.0
  %v2440 = vmax.f32 %v2424, 0.0
  %v2441 = vmax.f32 %v2425, 0.0
  %v2442 = vmax.f32 %v2426, 0.0
  %v2443 = vmax.f32 %v2427, 0.0
  %v2444 = vmax.f32 %v2428, 0.0
  %v2445 = vmax.f32 %v2429, 0.0
  %v2446 = vmax.f32 %v2430, 0.0
  %v2447 = vmax.f32 %v2431, 0.0
  %2448 = vst [vmem:[%s4] sm:$0xf] 0
  %2449 = vst [vmem:[%s4 + $0x4] sm:$0x1] 0
  %2450 = vst [vmem:[%s4 + $0x50] sm:$0xf] 0
  %2451 = vst [vmem:[%s4 + $0x54] sm:$0x1] 0
  %s2452 = scalar_lea.vmem %s4, 72
  %2453 = vst [vmem:[%s2452] sm:$0xf] 0
  %2454 = vst [vmem:[%s2452 + $0x4] sm:$0x1] 0
  %2455 = vst [vmem:[%s2452 + $0x50] sm:$0xf] 0
  %2456 = vst [vmem:[%s2452 + $0x54] sm:$0x1] 0
  %vm2457 = vcmask 1040384
  %vm2458 = vmand %vm2457, %vm205
  %v2459 = vld [vmem:[%s4] sm:$0x1]
  %v2460 = vsel %vm2458, 0, %v2459
  %2461 = vst [vmem:[%s4] sm:$0x1] %v2460
  %v2462 = vld [vmem:[%s4 + $0x8] sm:$0x1]
  %v2463 = vsel %vm2458, 0, %v2462
  %2464 = vst [vmem:[%s4 + $0x8] sm:$0x1] %v2463
  %v2465 = vld [vmem:[%s4 + $0x10] sm:$0x1]
  %v2466 = vsel %vm2458, 0, %v2465
  %2467 = vst [vmem:[%s4 + $0x10] sm:$0x1] %v2466
  %v2468 = vld [vmem:[%s4 + $0x18] sm:$0x1]
  %v2469 = vsel %vm2458, 0, %v2468
  %2470 = vst [vmem:[%s4 + $0x18] sm:$0x1] %v2469
  %v2471 = vld [vmem:[%s4 + $0x20] sm:$0x1]
  %v2472 = vsel %vm2458, 0, %v2471
  %2473 = vst [vmem:[%s4 + $0x20] sm:$0x1] %v2472
  %v2474 = vld [vmem:[%s4 + $0x28] sm:$0x1]
  %v2475 = vsel %vm2458, 0, %v2474
  %2476 = vst [vmem:[%s4 + $0x28] sm:$0x1] %v2475
  %v2477 = vld [vmem:[%s4 + $0x30] sm:$0x1]
  %v2478 = vsel %vm2458, 0, %v2477
  %2479 = vst [vmem:[%s4 + $0x30] sm:$0x1] %v2478
  %v2480 = vld [vmem:[%s4 + $0x38] sm:$0x1]
  %v2481 = vsel %vm2458, 0, %v2480
  %2482 = vst [vmem:[%s4 + $0x38] sm:$0x1] %v2481
  %v2483 = vld [vmem:[%s4 + $0x40] sm:$0x1]
  %v2484 = vsel %vm2458, 0, %v2483
  %2485 = vst [vmem:[%s4 + $0x40] sm:$0x1] %v2484
  %v2486 = vld [vmem:[%s4 + $0x48] sm:$0x1]
  %v2487 = vsel %vm2458, 0, %v2486
  %2488 = vst [vmem:[%s4 + $0x48] sm:$0x1] %v2487
  %v2489 = vld [vmem:[%s4 + $0x50] sm:$0x1]
  %v2490 = vsel %vm2458, 0, %v2489
  %2491 = vst [vmem:[%s4 + $0x50] sm:$0x1] %v2490
  %v2492 = vld [vmem:[%s4 + $0x58] sm:$0x1]
  %v2493 = vsel %vm2458, 0, %v2492
  %2494 = vst [vmem:[%s4 + $0x58] sm:$0x1] %v2493
  %v2495 = vld [vmem:[%s4 + $0x60] sm:$0x1]
  %v2496 = vsel %vm2458, 0, %v2495
  %2497 = vst [vmem:[%s4 + $0x60] sm:$0x1] %v2496
  %v2498 = vld [vmem:[%s4 + $0x68] sm:$0x1]
  %v2499 = vsel %vm2458, 0, %v2498
  %2500 = vst [vmem:[%s4 + $0x68] sm:$0x1] %v2499
  %v2501 = vld [vmem:[%s4 + $0x70] sm:$0x1]
  %v2502 = vsel %vm2458, 0, %v2501
  %2503 = vst [vmem:[%s4 + $0x70] sm:$0x1] %v2502
  %v2504 = vld [vmem:[%s4 + $0x78] sm:$0x1]
  %v2505 = vsel %vm2458, 0, %v2504
  %2506 = vst [vmem:[%s4 + $0x78] sm:$0x1] %v2505
  %v2507 = vld [vmem:[%s4 + $0x80] sm:$0x1]
  %v2508 = vsel %vm2458, 0, %v2507
  %2509 = vst [vmem:[%s4 + $0x80] sm:$0x1] %v2508
  %v2510 = vld [vmem:[%s4 + $0x88] sm:$0x1]
  %v2511 = vsel %vm2458, 0, %v2510
  %2512 = vst [vmem:[%s4 + $0x88] sm:$0x1] %v2511
  %v2513 = vld [vmem:[%s4 + $0x90] sm:$0x1]
  %v2514 = vsel %vm2458, 0, %v2513
  %2515 = vst [vmem:[%s4 + $0x90] sm:$0x1] %v2514
  %v2516 = vld [vmem:[%s4 + $0x98] sm:$0x1]
  %v2517 = vsel %vm2458, 0, %v2516
  %2518 = vst [vmem:[%s4 + $0x98] sm:$0x1] %v2517
  %vm2519 = vmand %vm2457, %vm267
  %v2520 = vld [vmem:[%s4 + $0x4] sm:$0x1]
  %v2521 = vsel %vm2519, 0, %v2520
  %2522 = vst [vmem:[%s4 + $0x4] sm:$0x1] %v2521
  %v2523 = vld [vmem:[%s4 + $0xc] sm:$0x1]
  %v2524 = vsel %vm2519, 0, %v2523
  %2525 = vst [vmem:[%s4 + $0xc] sm:$0x1] %v2524
  %v2526 = vld [vmem:[%s4 + $0x14] sm:$0x1]
  %v2527 = vsel %vm2519, 0, %v2526
  %2528 = vst [vmem:[%s4 + $0x14] sm:$0x1] %v2527
  %v2529 = vld [vmem:[%s4 + $0x1c] sm:$0x1]
  %v2530 = vsel %vm2519, 0, %v2529
  %2531 = vst [vmem:[%s4 + $0x1c] sm:$0x1] %v2530
  %v2532 = vld [vmem:[%s4 + $0x24] sm:$0x1]
  %v2533 = vsel %vm2519, 0, %v2532
  %2534 = vst [vmem:[%s4 + $0x24] sm:$0x1] %v2533
  %v2535 = vld [vmem:[%s4 + $0x2c] sm:$0x1]
  %v2536 = vsel %vm2519, 0, %v2535
  %2537 = vst [vmem:[%s4 + $0x2c] sm:$0x1] %v2536
  %v2538 = vld [vmem:[%s4 + $0x34] sm:$0x1]
  %v2539 = vsel %vm2519, 0, %v2538
  %2540 = vst [vmem:[%s4 + $0x34] sm:$0x1] %v2539
  %v2541 = vld [vmem:[%s4 + $0x3c] sm:$0x1]
  %v2542 = vsel %vm2519, 0, %v2541
  %2543 = vst [vmem:[%s4 + $0x3c] sm:$0x1] %v2542
  %v2544 = vld [vmem:[%s4 + $0x44] sm:$0x1]
  %v2545 = vsel %vm2519, 0, %v2544
  %2546 = vst [vmem:[%s4 + $0x44] sm:$0x1] %v2545
  %v2547 = vld [vmem:[%s4 + $0x4c] sm:$0x1]
  %v2548 = vsel %vm2519, 0, %v2547
  %2549 = vst [vmem:[%s4 + $0x4c] sm:$0x1] %v2548
  %v2550 = vld [vmem:[%s4 + $0x54] sm:$0x1]
  %v2551 = vsel %vm2519, 0, %v2550
  %2552 = vst [vmem:[%s4 + $0x54] sm:$0x1] %v2551
  %v2553 = vld [vmem:[%s4 + $0x5c] sm:$0x1]
  %v2554 = vsel %vm2519, 0, %v2553
  %2555 = vst [vmem:[%s4 + $0x5c] sm:$0x1] %v2554
  %v2556 = vld [vmem:[%s4 + $0x64] sm:$0x1]
  %v2557 = vsel %vm2519, 0, %v2556
  %2558 = vst [vmem:[%s4 + $0x64] sm:$0x1] %v2557
  %v2559 = vld [vmem:[%s4 + $0x6c] sm:$0x1]
  %v2560 = vsel %vm2519, 0, %v2559
  %2561 = vst [vmem:[%s4 + $0x6c] sm:$0x1] %v2560
  %v2562 = vld [vmem:[%s4 + $0x74] sm:$0x1]
  %v2563 = vsel %vm2519, 0, %v2562
  %2564 = vst [vmem:[%s4 + $0x74] sm:$0x1] %v2563
  %v2565 = vld [vmem:[%s4 + $0x7c] sm:$0x1]
  %v2566 = vsel %vm2519, 0, %v2565
  %2567 = vst [vmem:[%s4 + $0x7c] sm:$0x1] %v2566
  %v2568 = vld [vmem:[%s4 + $0x84] sm:$0x1]
  %v2569 = vsel %vm2519, 0, %v2568
  %2570 = vst [vmem:[%s4 + $0x84] sm:$0x1] %v2569
  %v2571 = vld [vmem:[%s4 + $0x8c] sm:$0x1]
  %v2572 = vsel %vm2519, 0, %v2571
  %2573 = vst [vmem:[%s4 + $0x8c] sm:$0x1] %v2572
  %v2574 = vld [vmem:[%s4 + $0x94] sm:$0x1]
  %v2575 = vsel %vm2519, 0, %v2574
  %2576 = vst [vmem:[%s4 + $0x94] sm:$0x1] %v2575
  %v2577 = vld [vmem:[%s4 + $0x9c] sm:$0x1]
  %v2578 = vsel %vm2519, 0, %v2577
  %2579 = vst [vmem:[%s4 + $0x9c] sm:$0x1] %v2578
  %v2580 = vpack.c.bf16 %v2432, %v2432
  %v2581 = vpack.c.bf16 %v2433, %v2433
  %v2582 = vpack.c.bf16 %v2434, %v2434
  %v2583 = vpack.c.bf16 %v2435, %v2435
  %v2584 = vpack.c.bf16 %v2436, %v2436
  %v2585 = vpack.c.bf16 %v2437, %v2437
  %v2586 = vpack.c.bf16 %v2438, %v2438
  %v2587 = vpack.c.bf16 %v2439, %v2439
  %v2588 = vpack.c.bf16 %v2440, %v2440
  %v2589 = vpack.c.bf16 %v2441, %v2441
  %v2590 = vpack.c.bf16 %v2442, %v2442
  %v2591 = vpack.c.bf16 %v2443, %v2443
  %v2592 = vpack.c.bf16 %v2444, %v2444
  %v2593 = vpack.c.bf16 %v2445, %v2445
  %v2594 = vpack.c.bf16 %v2446, %v2446
  %v2595 = vpack.c.bf16 %v2447, %v2447
  %v2612 = vunpack.c.l.b16 %v2580
  %v2613 = vunpack.c.l.b16 %v2581
  %v2614 = vunpack.c.l.b16 %v2582
  %v2615 = vunpack.c.l.b16 %v2583
  %v2616 = vunpack.c.l.b16 %v2584
  %v2617 = vunpack.c.l.b16 %v2585
  %v2618 = vunpack.c.l.b16 %v2586
  %v2619 = vunpack.c.l.b16 %v2587
  %v2620 = vunpack.c.l.b16 %v2588
  %v2621 = vunpack.c.l.b16 %v2589
  %v2622 = vunpack.c.l.b16 %v2590
  %v2623 = vunpack.c.l.b16 %v2591
  %v2624 = vunpack.c.l.b16 %v2592
  %v2625 = vunpack.c.l.b16 %v2593
  %v2626 = vunpack.c.l.b16 %v2594
  %v2627 = vunpack.c.l.b16 %v2595
  %v2628 = vpack.c.b16 %v2612, %v2612
  %v2629 = vpack.c.b16 %v2613, %v2613
  %v2630 = vpack.c.b16 %v2614, %v2614
  %v2631 = vpack.c.b16 %v2615, %v2615
  %v2632 = vpack.c.b16 %v2616, %v2616
  %v2633 = vpack.c.b16 %v2617, %v2617
  %v2634 = vpack.c.b16 %v2618, %v2618
  %v2635 = vpack.c.b16 %v2619, %v2619
  %v2636 = vpack.c.b16 %v2620, %v2620
  %v2637 = vpack.c.b16 %v2621, %v2621
  %v2638 = vpack.c.b16 %v2622, %v2622
  %v2639 = vpack.c.b16 %v2623, %v2623
  %v2640 = vpack.c.b16 %v2624, %v2624
  %v2641 = vpack.c.b16 %v2625, %v2625
  %v2642 = vpack.c.b16 %v2626, %v2626
  %v2643 = vpack.c.b16 %v2627, %v2627
  %v2645 = vshrl.u32 %v2628, 16
  %v2647 = vrot.slane %v2645, 7
  %v2648 = vshll.u32 %v2628, 16
  %v2650 = vor.u32 %v2647, %v2648
  %v2651 = vrot.slane %v2647, 4
  %v2653 = vshrl.u32 %v2629, 16
  %v2655 = vrot.slane %v2653, 7
  %v2656 = vshll.u32 %v2629, 16
  %v2658 = vor.u32 %v2655, %v2656
  %v2659 = vrot.slane %v2655, 4
  %v2661 = vshrl.u32 %v2630, 16
  %v2663 = vrot.slane %v2661, 7
  %v2664 = vshll.u32 %v2630, 16
  %v2666 = vor.u32 %v2663, %v2664
  %v2667 = vrot.slane %v2663, 4
  %v2669 = vshrl.u32 %v2631, 16
  %v2671 = vrot.slane %v2669, 7
  %v2672 = vshll.u32 %v2631, 16
  %v2674 = vor.u32 %v2671, %v2672
  %v2675 = vrot.slane %v2671, 4
  %v2677 = vshrl.u32 %v2632, 16
  %v2679 = vrot.slane %v2677, 7
  %v2680 = vshll.u32 %v2632, 16
  %v2682 = vor.u32 %v2679, %v2680
  %v2683 = vrot.slane %v2679, 4
  %v2685 = vshrl.u32 %v2633, 16
  %v2687 = vrot.slane %v2685, 7
  %v2688 = vshll.u32 %v2633, 16
  %v2690 = vor.u32 %v2687, %v2688
  %v2691 = vrot.slane %v2687, 4
  %v2693 = vshrl.u32 %v2634, 16
  %v2695 = vrot.slane %v2693, 7
  %v2696 = vshll.u32 %v2634, 16
  %v2698 = vor.u32 %v2695, %v2696
  %v2699 = vrot.slane %v2695, 4
  %v2701 = vshrl.u32 %v2635, 16
  %v2703 = vrot.slane %v2701, 7
  %v2704 = vshll.u32 %v2635, 16
  %v2706 = vor.u32 %v2703, %v2704
  %v2707 = vrot.slane %v2703, 4
  %v2709 = vshrl.u32 %v2636, 16
  %v2711 = vrot.slane %v2709, 7
  %v2712 = vshll.u32 %v2636, 16
  %v2714 = vor.u32 %v2711, %v2712
  %v2715 = vrot.slane %v2711, 4
  %v2717 = vshrl.u32 %v2637, 16
  %v2719 = vrot.slane %v2717, 7
  %v2720 = vshll.u32 %v2637, 16
  %v2722 = vor.u32 %v2719, %v2720
  %v2723 = vrot.slane %v2719, 4
  %v2725 = vshrl.u32 %v2638, 16
  %v2727 = vrot.slane %v2725, 7
  %v2728 = vshll.u32 %v2638, 16
  %v2730 = vor.u32 %v2727, %v2728
  %v2731 = vrot.slane %v2727, 4
  %v2733 = vshrl.u32 %v2639, 16
  %v2735 = vrot.slane %v2733, 7
  %v2736 = vshll.u32 %v2639, 16
  %v2738 = vor.u32 %v2735, %v2736
  %v2739 = vrot.slane %v2735, 4
  %v2741 = vshrl.u32 %v2640, 16
  %v2743 = vrot.slane %v2741, 7
  %v2744 = vshll.u32 %v2640, 16
  %v2746 = vor.u32 %v2743, %v2744
  %v2747 = vrot.slane %v2743, 4
  %v2749 = vshrl.u32 %v2641, 16
  %v2751 = vrot.slane %v2749, 7
  %v2752 = vshll.u32 %v2641, 16
  %v2754 = vor.u32 %v2751, %v2752
  %v2755 = vrot.slane %v2751, 4
  %v2757 = vshrl.u32 %v2642, 16
  %v2759 = vrot.slane %v2757, 7
  %v2760 = vshll.u32 %v2642, 16
  %v2762 = vor.u32 %v2759, %v2760
  %v2763 = vrot.slane %v2759, 4
  %v2765 = vshrl.u32 %v2643, 16
  %v2767 = vrot.slane %v2765, 7
  %v2768 = vshll.u32 %v2643, 16
  %v2770 = vor.u32 %v2767, %v2768
  %v2771 = vrot.slane %v2767, 4
  %s2804 = scalar_lea.vmem %s4, 8
  %vm2805 = vcmask 1043456
  %vm2806 = vmand %vm2805, %vm267
  %v2807 = vld [vmem:[%s2804] sm:$0xf]
  %v2808 = vsel %vm2806, %v2650, %v2807
  %2809 = vst [vmem:[%s2804] sm:$0xf] %v2808
  %v2810 = vld [vmem:[%s2804 + $0x4] sm:$0x1]
  %v2811 = vsel %vm2458, %v2651, %v2810
  %2812 = vst [vmem:[%s2804 + $0x4] sm:$0x1] %v2811
  %v2813 = vld [vmem:[%s2804 + $0x8] sm:$0xf]
  %v2814 = vsel %vm2806, %v2658, %v2813
  %2815 = vst [vmem:[%s2804 + $0x8] sm:$0xf] %v2814
  %v2816 = vld [vmem:[%s2804 + $0xc] sm:$0x1]
  %v2817 = vsel %vm2458, %v2659, %v2816
  %2818 = vst [vmem:[%s2804 + $0xc] sm:$0x1] %v2817
  %v2819 = vld [vmem:[%s2804 + $0x10] sm:$0xf]
  %v2820 = vsel %vm2806, %v2666, %v2819
  %2821 = vst [vmem:[%s2804 + $0x10] sm:$0xf] %v2820
  %v2822 = vld [vmem:[%s2804 + $0x14] sm:$0x1]
  %v2823 = vsel %vm2458, %v2667, %v2822
  %2824 = vst [vmem:[%s2804 + $0x14] sm:$0x1] %v2823
  %v2825 = vld [vmem:[%s2804 + $0x18] sm:$0xf]
  %v2826 = vsel %vm2806, %v2674, %v2825
  %2827 = vst [vmem:[%s2804 + $0x18] sm:$0xf] %v2826
  %v2828 = vld [vmem:[%s2804 + $0x1c] sm:$0x1]
  %v2829 = vsel %vm2458, %v2675, %v2828
  %2830 = vst [vmem:[%s2804 + $0x1c] sm:$0x1] %v2829
  %v2831 = vld [vmem:[%s2804 + $0x20] sm:$0xf]
  %v2832 = vsel %vm2806, %v2682, %v2831
  %2833 = vst [vmem:[%s2804 + $0x20] sm:$0xf] %v2832
  %v2834 = vld [vmem:[%s2804 + $0x24] sm:$0x1]
  %v2835 = vsel %vm2458, %v2683, %v2834
  %2836 = vst [vmem:[%s2804 + $0x24] sm:$0x1] %v2835
  %v2837 = vld [vmem:[%s2804 + $0x28] sm:$0xf]
  %v2838 = vsel %vm2806, %v2690, %v2837
  %2839 = vst [vmem:[%s2804 + $0x28] sm:$0xf] %v2838
  %v2840 = vld [vmem:[%s2804 + $0x2c] sm:$0x1]
  %v2841 = vsel %vm2458, %v2691, %v2840
  %2842 = vst [vmem:[%s2804 + $0x2c] sm:$0x1] %v2841
  %v2843 = vld [vmem:[%s2804 + $0x30] sm:$0xf]
  %v2844 = vsel %vm2806, %v2698, %v2843
  %2845 = vst [vmem:[%s2804 + $0x30] sm:$0xf] %v2844
  %v2846 = vld [vmem:[%s2804 + $0x34] sm:$0x1]
  %v2847 = vsel %vm2458, %v2699, %v2846
  %2848 = vst [vmem:[%s2804 + $0x34] sm:$0x1] %v2847
  %v2849 = vld [vmem:[%s2804 + $0x38] sm:$0xf]
  %v2850 = vsel %vm2806, %v2706, %v2849
  %2851 = vst [vmem:[%s2804 + $0x38] sm:$0xf] %v2850
  %v2852 = vld [vmem:[%s2804 + $0x3c] sm:$0x1]
  %v2853 = vsel %vm2458, %v2707, %v2852
  %2854 = vst [vmem:[%s2804 + $0x3c] sm:$0x1] %v2853
  %v2855 = vld [vmem:[%s2804 + $0x50] sm:$0xf]
  %v2856 = vsel %vm2806, %v2714, %v2855
  %2857 = vst [vmem:[%s2804 + $0x50] sm:$0xf] %v2856
  %v2858 = vld [vmem:[%s2804 + $0x54] sm:$0x1]
  %v2859 = vsel %vm2458, %v2715, %v2858
  %2860 = vst [vmem:[%s2804 + $0x54] sm:$0x1] %v2859
  %v2861 = vld [vmem:[%s2804 + $0x58] sm:$0xf]
  %v2862 = vsel %vm2806, %v2722, %v2861
  %2863 = vst [vmem:[%s2804 + $0x58] sm:$0xf] %v2862
  %v2864 = vld [vmem:[%s2804 + $0x5c] sm:$0x1]
  %v2865 = vsel %vm2458, %v2723, %v2864
  %2866 = vst [vmem:[%s2804 + $0x5c] sm:$0x1] %v2865
  %v2867 = vld [vmem:[%s2804 + $0x60] sm:$0xf]
  %v2868 = vsel %vm2806, %v2730, %v2867
  %2869 = vst [vmem:[%s2804 + $0x60] sm:$0xf] %v2868
  %v2870 = vld [vmem:[%s2804 + $0x64] sm:$0x1]
  %v2871 = vsel %vm2458, %v2731, %v2870
  %2872 = vst [vmem:[%s2804 + $0x64] sm:$0x1] %v2871
  %v2873 = vld [vmem:[%s2804 + $0x68] sm:$0xf]
  %v2874 = vsel %vm2806, %v2738, %v2873
  %2875 = vst [vmem:[%s2804 + $0x68] sm:$0xf] %v2874
  %v2876 = vld [vmem:[%s2804 + $0x6c] sm:$0x1]
  %v2877 = vsel %vm2458, %v2739, %v2876
  %2878 = vst [vmem:[%s2804 + $0x6c] sm:$0x1] %v2877
  %v2879 = vld [vmem:[%s2804 + $0x70] sm:$0xf]
  %v2880 = vsel %vm2806, %v2746, %v2879
  %2881 = vst [vmem:[%s2804 + $0x70] sm:$0xf] %v2880
  %v2882 = vld [vmem:[%s2804 + $0x74] sm:$0x1]
  %v2883 = vsel %vm2458, %v2747, %v2882
  %2884 = vst [vmem:[%s2804 + $0x74] sm:$0x1] %v2883
  %v2885 = vld [vmem:[%s2804 + $0x78] sm:$0xf]
  %v2886 = vsel %vm2806, %v2754, %v2885
  %2887 = vst [vmem:[%s2804 + $0x78] sm:$0xf] %v2886
  %v2888 = vld [vmem:[%s2804 + $0x7c] sm:$0x1]
  %v2889 = vsel %vm2458, %v2755, %v2888
  %2890 = vst [vmem:[%s2804 + $0x7c] sm:$0x1] %v2889
  %v2891 = vld [vmem:[%s2804 + $0x80] sm:$0xf]
  %v2892 = vsel %vm2806, %v2762, %v2891
  %2893 = vst [vmem:[%s2804 + $0x80] sm:$0xf] %v2892
  %v2894 = vld [vmem:[%s2804 + $0x84] sm:$0x1]
  %v2895 = vsel %vm2458, %v2763, %v2894
  %2896 = vst [vmem:[%s2804 + $0x84] sm:$0x1] %v2895
  %v2897 = vld [vmem:[%s2804 + $0x88] sm:$0xf]
  %v2898 = vsel %vm2806, %v2770, %v2897
  %2899 = vst [vmem:[%s2804 + $0x88] sm:$0xf] %v2898
  %v2900 = vld [vmem:[%s2804 + $0x8c] sm:$0x1]
  %v2901 = vsel %vm2458, %v2771, %v2900
  %2902 = vst [vmem:[%s2804 + $0x8c] sm:$0x1] %v2901
  // Predicated region
  $region18: #{tpu_custom_call.1} parent=0 // pred_check
    _
  $region19: #{tpu_custom_call.1} parent=0 // pred_check_branch
    %2904 = sbr.rel (0) target = $region21
  $region20: #{tpu_custom_call.1} parent=0 // pred_region
    _
  $region21: #{tpu_custom_call.1} parent=0 // pred_fallthru
    _
  // Predicated region
  $region22: #{tpu_custom_call.1} parent=0 // pred_check
    _
  $region23: #{tpu_custom_call.1} parent=0 // pred_check_branch
    %2906 = sbr.rel (0) target = $region25
  $region24: #{tpu_custom_call.1} parent=0 // pred_region
    _
  $region25: #{tpu_custom_call.1} parent=0 // pred_fallthru
    _

</llo_original>
